<compile_context>
chip_gen: v7x
topology: tpu7x:2x2x1
jax: 0.10.0
libtpu: 0.0.40
codegen_flags: <defaults>
</compile_context>

<pallas_src>
import jax
import jax.numpy as jnp
from jax.experimental import pallas as pl
from jax.experimental.pallas import tpu as pltpu


# ---------------------------------------------------------------------------
# Fused CSDI training-loss kernel
# ---------------------------------------------------------------------------
def _fused_csdi_loss_kernel(scal_ref,    # SMEM (3, B): sqrt(a_t), sqrt(1-a_t), b2
                            data_ref,    # (1, 4, K, Lt): [obs, cond_mask, obs_mask, noise]
                            base_ref,    # (1, H, Lt): W1_time@[sin;cos] + b1 + w_t*(t/T)
                            wsmall_ref,  # (H, 8): cols [w_cond, w_noisy, w_mask, 0...]
                            w2t_ref,     # (1, H)  W2 transposed
                            fc_ref,      # (H, K)  feature-embedding contribution
                            anorm_ref,   # (K, K)  normalized causal graph
                            sq_ref,      # out (1,1,1,1) partial sum of sq. masked residual
                            cnt_ref,     # out (1,1,1,1) partial sum of target mask
                            pred_ref):   # scratch VMEM (K, Lt)
    b = pl.program_id(0)
    K = pred_ref.shape[0]

    sa = scal_ref[0, b]          # sqrt(alpha_t)
    sb = scal_ref[1, b]          # sqrt(1 - alpha_t)
    b2 = scal_ref[2, b]          # output bias (shared)

    wsm = wsmall_ref[...]
    w_cond = wsm[:, 0:1]
    w_noisy = wsm[:, 1:2]
    w_mask = wsm[:, 2:3]
    w2t = w2t_ref[...]
    fc = fc_ref[...]

    # Per-feature hidden layer + 1x1-conv output, written row-by-row into the pred
    # scratch.  Rows are read from the packed data ref inside the loop so no (K, Lt)
    # temporaries are carried across iterations.
    for k in range(K):                                   # static shape -> static unroll
        obs_k = data_ref[0, 0, k:k + 1, :]               # (1, Lt)
        cm_k = data_ref[0, 1, k:k + 1, :]
        nz_k = data_ref[0, 3, k:k + 1, :]
        noisy_k = sa * obs_k + sb * nz_k                 # forward diffusion
        hk = (base_ref[0]
              + fc[:, k:k + 1]
              + w_cond * (cm_k * obs_k)                  # cond_obs channel
              + w_noisy * ((1.0 - cm_k) * noisy_k)       # noisy_target channel
              + w_mask * cm_k)                           # cond-mask side channel
        hk = jnp.maximum(hk, 0.0)
        pred_ref[k:k + 1, :] = (
            jnp.dot(w2t, hk, preferred_element_type=jnp.float32) + b2)

    # Causal GCN as a single MXU matmul over the feature axis.
    gcn = jnp.dot(anorm_ref[...], pred_ref[...],
                  preferred_element_type=jnp.float32)    # (K, Lt)

    cm = data_ref[0, 1]
    om = data_ref[0, 2]
    nz = data_ref[0, 3]
    tmask = om - cm
    resid = (nz - gcn) * tmask

    # Per-(batch, L-tile) partial sums; reduced outside the kernel.
    sq_ref[...] = jnp.zeros_like(sq_ref) + jnp.sum(resid * resid)
    cnt_ref[...] = jnp.zeros_like(cnt_ref) + jnp.sum(tmask)


def _round_up(x, m):
    return ((x + m - 1) // m) * m


def _pick_l_tile(l_pad, max_tile=1024):
    """Largest 128-multiple divisor of l_pad that is <= max_tile."""
    best = 128
    d = 128
    while d <= min(l_pad, max_tile):
        if l_pad % d == 0:
            best = d
        d += 128
    return best


def fused_csdi_loss(params, observed_data, cond_mask, observed_mask,
                    observed_tp, t, noise):
    """Fused Pallas implementation of CSDI_base.calc_loss (training path)."""
    f32 = jnp.float32
    B, K, L = observed_data.shape
    Tt = int(params["emb_time_dim"])
    assert Tt % 2 == 0
    Tf = params["embed_weight"].shape[1]
    H = params["w1"].shape[1]
    num_steps = params["num_steps"]

    # ---- lane-dense padding of the time axis (masks pad with 0 -> zero contribution)
    L_pad = _round_up(L, 128)
    pad = L_pad - L

    def pad_l(x):
        return jnp.pad(x, ((0, 0), (0, 0), (0, pad))) if pad else x

    observed_data = pad_l(observed_data.astype(f32))
    cond_mask = pad_l(cond_mask.astype(f32))
    observed_mask = pad_l(observed_mask.astype(f32))
    noise = pad_l(noise.astype(f32))
    tp = observed_tp.astype(f32)
    if pad:
        tp = jnp.pad(tp, ((0, 0), (0, pad)))

    # ---- pack the four data streams into one input (single DMA per grid step)
    data = jnp.stack([observed_data, cond_mask, observed_mask, noise], axis=1)

    # ---- per-batch diffusion scalars -> SMEM
    alpha_t = params["alpha"][t]
    b2s = jnp.full((B,), params["b2"].reshape(()), f32)
    scal = jnp.stack([jnp.sqrt(alpha_t), jnp.sqrt(1.0 - alpha_t), b2s],
                     axis=0).astype(f32)

    # ---- W1 channel groups: [cond_obs, noisy_target, time(Tt), feat(Tf), mask, t]
    w1 = params["w1"].astype(f32)                                     # (Cin, H)
    w1_time = w1[2:2 + Tt]
    w_time_t = jnp.concatenate([jnp.transpose(w1_time[0::2]),
                                jnp.transpose(w1_time[1::2])], axis=1)  # (H, Tt) [sin|cos]
    w1_feat = w1[2 + Tt:2 + Tt + Tf]                                  # (Tf, H)
    fc = jnp.transpose(params["embed_weight"].astype(f32) @ w1_feat)  # (H, K)
    w_small = jnp.zeros((H, 8), f32)
    w_small = w_small.at[:, 0].set(w1[0])                             # cond_obs
    w_small = w_small.at[:, 1].set(w1[1])                             # noisy_target
    w_small = w_small.at[:, 2].set(w1[2 + Tt + Tf])                   # cond-mask channel
    w2_t = jnp.transpose(params["w2"].astype(f32))                    # (1, H)
    a_norm = params["a_norm"].astype(f32)

    # ---- hoisted time embedding / bias / diffusion-step channel (tiny XLA einsum):
    #      base[b] = W1_time @ [sin(angle_b); cos(angle_b)] + b1 + w_t * t_b/num_steps
    inv_freq = 1.0 / (10000.0 ** (jnp.arange(0, Tt, 2, dtype=f32) / Tt))  # (Tt/2,)
    angle = tp[:, None, :] * inv_freq[None, :, None]                      # (B, Tt/2, L_pad)
    trig = jnp.concatenate([jnp.sin(angle), jnp.cos(angle)], axis=1)      # (B, Tt, L_pad)
    b1 = params["b1"].reshape(-1).astype(f32)
    w_t_chan = w1[2 + Tt + Tf + 1]
    tn = t.astype(f32) / num_steps
    base = (jnp.einsum("ht,btl->bhl", w_time_t, trig)
            + b1[None, :, None]
            + w_t_chan[None, :, None] * tn[:, None, None]).astype(f32)    # (B, H, L_pad)

    Lt = _pick_l_tile(L_pad)
    nL = L_pad // Lt
    grid = (B, nL)

    sq_part, cnt_part = pl.pallas_call(
        _fused_csdi_loss_kernel,
        out_shape=(jax.ShapeDtypeStruct((B, nL, 1, 1), f32),
                   jax.ShapeDtypeStruct((B, nL, 1, 1), f32)),
        grid=grid,
        in_specs=[
            pl.BlockSpec(memory_space=pltpu.MemorySpace.SMEM),            # scal (3, B)
            pl.BlockSpec((1, 4, K, Lt), lambda b, li: (b, 0, 0, li)),     # packed data
            pl.BlockSpec((1, H, Lt), lambda b, li: (b, 0, li)),           # base
            pl.BlockSpec((H, 8), lambda b, li: (0, 0)),                   # w_small (resident)
            pl.BlockSpec((1, H), lambda b, li: (0, 0)),                   # w2_t
            pl.BlockSpec((H, K), lambda b, li: (0, 0)),                   # fc
            pl.BlockSpec((K, K), lambda b, li: (0, 0)),                   # a_norm
        ],
        out_specs=(pl.BlockSpec((1, 1, 1, 1), lambda b, li: (b, li, 0, 0)),
                   pl.BlockSpec((1, 1, 1, 1), lambda b, li: (b, li, 0, 0))),
        scratch_shapes=[pltpu.VMEM((K, Lt), f32)],
        compiler_params=pltpu.CompilerParams(
            dimension_semantics=("parallel", "parallel"),
            vmem_limit_bytes=32 * 1024 * 1024),
    )(scal, data, base, w_small, w2_t, fc, a_norm)

    sq_total = jnp.sum(sq_part)
    cnt_total = jnp.sum(cnt_part)
    return sq_total / jnp.where(cnt_total > 0, cnt_total, 1.0)


# ---------------------------------------------------------------------------
# Plain-JAX glue reproducing CSDI_base helpers (host / XLA side)
# ---------------------------------------------------------------------------
def get_randmask(key, observed_mask):
    """jax.random version of CSDI_base.get_randmask (single sort + threshold)."""
    B = observed_mask.shape[0]
    N = observed_mask.size // B
    k1, k2 = jax.random.split(key)
    rand = jax.random.uniform(k1, observed_mask.shape, jnp.float32) * observed_mask
    rand_flat = rand.reshape(B, N)
    sample_ratio = jax.random.uniform(k2, (B,), jnp.float32)
    num_observed = observed_mask.reshape(B, N).sum(-1)
    num_masked = jnp.round(num_observed * sample_ratio).astype(jnp.int32)
    sorted_vals = jnp.sort(rand_flat, axis=-1)                    # ascending
    idx = jnp.clip(N - num_masked, 0, N - 1)
    thresh = jnp.take_along_axis(sorted_vals, idx[:, None], axis=-1)
    thresh = jnp.where(num_masked[:, None] > 0, thresh, jnp.inf)
    keep = (rand_flat > 0.0) & (rand_flat < thresh)
    return keep.reshape(observed_mask.shape).astype(jnp.float32)


def normalize_graph(A):
    K = A.shape[0]
    A_hat = A + jnp.eye(K, dtype=A.dtype)
    d = jnp.sum(A_hat, axis=-1) ** (-0.5)
    return (A_hat * d[:, None]) * d[None, :]          # D^-1/2 A_hat D^-1/2


def csdi_forward(params, batch, key, is_train=1):
    observed_data = batch["observed_data"].astype(jnp.float32)
    observed_mask = batch["observed_mask"].astype(jnp.float32)
    observed_tp = batch["timepoints"].astype(jnp.float32)
    gt_mask = batch["gt_mask"].astype(jnp.float32)
    B, K, L = observed_data.shape

    k_mask, k_t, k_noise = jax.random.split(key, 3)
    if is_train == 0:
        cond_mask = gt_mask
    else:  # target_strategy == 'random'
        cond_mask = get_randmask(k_mask, observed_mask)

    t = jax.random.randint(k_t, (B,), 0, params["num_steps"])
    noise = jax.random.normal(k_noise, (B, K, L), jnp.float32)

    loss = fused_csdi_loss(params, observed_data, cond_mask, observed_mask,
                           observed_tp, t, noise)
    return loss, (cond_mask, t, noise)


def reference_loss(params, observed_data, cond_mask, observed_mask,
                   observed_tp, t, noise):
    """Un-fused pure-JAX reference (mirrors the original layer-by-layer path)."""
    f32 = jnp.float32
    B, K, L = observed_data.shape
    Tt = int(params["emb_time_dim"])
    Tf = params["embed_weight"].shape[1]
    num_steps = params["num_steps"]

    pos = observed_tp.astype(f32)[:, :, None]
    div = 1.0 / (10000.0 ** (jnp.arange(0, Tt, 2, dtype=f32) / Tt))
    pe = jnp.zeros((B, L, Tt), f32)
    pe = pe.at[:, :, 0::2].set(jnp.sin(pos * div))
    pe = pe.at[:, :, 1::2].set(jnp.cos(pos * div))
    t_emb = jnp.broadcast_to(pe[:, :, None, :], (B, L, K, Tt))
    f_emb = jnp.broadcast_to(params["embed_weight"][None, None], (B, L, K, Tf))
    side = jnp.concatenate([t_emb, f_emb], axis=-1)
    side = jnp.transpose(side, (0, 3, 2, 1))                        # (B, Tt+Tf, K, L)
    side = jnp.concatenate([side, cond_mask[:, None]], axis=1)

    alpha_t = params["alpha"][t]
    sa = jnp.sqrt(alpha_t)[:, None, None]
    sb = jnp.sqrt(1.0 - alpha_t)[:, None, None]
    noisy = sa * observed_data + sb * noise
    cond_obs = cond_mask * observed_data
    noisy_target = (1.0 - cond_mask) * noisy
    total_input = jnp.stack([cond_obs, noisy_target], axis=1)       # (B, 2, K, L)
    t_chan = jnp.broadcast_to((t.astype(f32) / num_steps)[:, None, None, None],
                              (B, 1, K, L))
    x = jnp.concatenate([total_input, side, t_chan], axis=1)        # (B, Cin, K, L)
    Cin = x.shape[1]
    xf = jnp.transpose(x, (0, 2, 3, 1)).reshape(B * K * L, Cin)
    h = jnp.maximum(xf @ params["w1"] + params["b1"], 0.0)
    pred = (h @ params["w2"] + params["b2"]).reshape(B, K, L)
    pred = jnp.einsum("ij,bjl->bil", params["a_norm"], pred)        # causal GCN
    tmask = observed_mask - cond_mask
    resid = (noise - pred) * tmask
    cnt = tmask.sum()
    return (resid ** 2).sum() / jnp.where(cnt > 0, cnt, 1.0)


# ---------------------------------------------------------------------------
if __name__ == "__main__":
    # small config
    B, K, L = 2, 8, 16
    emb_time_dim, emb_feature_dim = 32, 16
    num_steps, hidden = 4, 32
    beta_start, beta_end = 1e-4, 0.5

    # diffusion schedule ('quad')
    beta = jnp.linspace(beta_start ** 0.5, beta_end ** 0.5, num_steps,
                        dtype=jnp.float32) ** 2
    alpha = jnp.cumprod(1.0 - beta)

    key = jax.random.PRNGKey(0)
    ks = jax.random.split(key, 12)

    observed_data = jax.random.normal(ks[0], (B, K, L), jnp.float32)
    observed_mask = (jax.random.uniform(ks[1], (B, K, L)) > 0.2).astype(jnp.float32)
    gt_mask = observed_mask * (jax.random.uniform(ks[2], (B, K, L)) > 0.3
                               ).astype(jnp.float32)
    observed_tp = jnp.broadcast_to(jnp.arange(L, dtype=jnp.float32)[None], (B, L))

    embed_weight = jax.random.normal(ks[3], (K, emb_feature_dim), jnp.float32)
    causal_graph = jax.random.uniform(ks[4], (K, K), jnp.float32)

    side_dim = emb_time_dim + emb_feature_dim + 1          # is_unconditional=False
    c_in = 2 + side_dim + 1                                # diff inputs + side + t
    w1 = jax.random.normal(ks[5], (c_in, hidden), jnp.float32) * 0.1
    b1 = jax.random.normal(ks[6], (1, hidden), jnp.float32) * 0.01
    w2 = jax.random.normal(ks[7], (hidden, 1), jnp.float32) * 0.1
    b2 = jnp.zeros((1, 1), jnp.float32)

    params = {
        "embed_weight": embed_weight,
        "emb_time_dim": emb_time_dim,
        "alpha": alpha,
        "num_steps": num_steps,
        "a_norm": normalize_graph(causal_graph),
        "w1": w1, "b1": b1, "w2": w2, "b2": b2,
    }
    batch = {
        "observed_data": observed_data,
        "observed_mask": observed_mask,
        "timepoints": observed_tp,
        "gt_mask": gt_mask,
    }

    loss, (cond_mask, t, noise) = csdi_forward(params, batch, ks[8], is_train=1)
    loss = jax.block_until_ready(loss)
    assert loss.shape == () and bool(jnp.isfinite(loss))

    # verify the fused Pallas path against the un-fused pure-JAX reference
    ref = reference_loss(params, observed_data, cond_mask, observed_mask,
                         observed_tp, t, noise)
    ref = jax.block_until_ready(ref)
    assert jnp.allclose(loss, ref, rtol=2e-3, atol=1e-5), (loss, ref)

    print("KERNEL_OK")
</pallas_src>

<mosaic_0001>
module attributes {stable_mosaic.version = 11 : i64} {
  func.func @_fused_csdi_loss_kernel(%arg0: i32, %arg1: i32, %arg2: memref<3x2xf32, #tpu.memory_space<smem>>, %arg3: memref<1x4x8x128xf32, #tpu.memory_space<vmem>>, %arg4: memref<1x32x128xf32, #tpu.memory_space<vmem>>, %arg5: memref<32x8xf32, #tpu.memory_space<vmem>>, %arg6: memref<1x32xf32, #tpu.memory_space<vmem>>, %arg7: memref<32x8xf32, #tpu.memory_space<vmem>>, %arg8: memref<8x8xf32, #tpu.memory_space<vmem>>, %arg9: memref<1x1x1x1xf32, #tpu.memory_space<vmem>>, %arg10: memref<1x1x1x1xf32, #tpu.memory_space<vmem>>, %arg11: memref<8x128xf32, #tpu.memory_space<vmem>>) attributes {dimension_semantics = [#tpu.dimension_semantics<parallel>, #tpu.dimension_semantics<parallel>], iteration_bounds = array<i64: 2, 1>, scalar_prefetch = 0 : i64, scratch_operands = 1 : i64, tpu.core_type = #tpu.core_type<tc>, window_params = [{transform_indices = @transform_0, window_bounds = array<i64: 3, 2>}, {transform_indices = @transform_1, window_bounds = array<i64: 1, 4, 8, 128>}, {transform_indices = @transform_2, window_bounds = array<i64: 1, 32, 128>}, {pipeline_mode = #tpu.pipeline_mode<synchronous>, transform_indices = @transform_3, window_bounds = array<i64: 32, 8>}, {pipeline_mode = #tpu.pipeline_mode<synchronous>, transform_indices = @transform_4, window_bounds = array<i64: 1, 32>}, {pipeline_mode = #tpu.pipeline_mode<synchronous>, transform_indices = @transform_5, window_bounds = array<i64: 32, 8>}, {pipeline_mode = #tpu.pipeline_mode<synchronous>, transform_indices = @transform_6, window_bounds = array<i64: 8, 8>}, {transform_indices = @transform_7, window_bounds = array<i64: 1, 1, 1, 1>}, {transform_indices = @transform_8, window_bounds = array<i64: 1, 1, 1, 1>}]} {
    %c0 = arith.constant 0 : index
    %0 = arith.index_cast %arg0 : i32 to index
    %1 = memref.load %arg2[%c0, %0] : memref<3x2xf32, #tpu.memory_space<smem>>
    %c1 = arith.constant 1 : index
    %2 = arith.index_cast %arg0 : i32 to index
    %3 = memref.load %arg2[%c1, %2] : memref<3x2xf32, #tpu.memory_space<smem>>
    %c2 = arith.constant 2 : index
    %4 = arith.index_cast %arg0 : i32 to index
    %5 = memref.load %arg2[%c2, %4] : memref<3x2xf32, #tpu.memory_space<smem>>
    %c0_0 = arith.constant 0 : index
    %c0_1 = arith.constant 0 : index
    %6 = vector.load %arg5[%c0_0, %c0_1] : memref<32x8xf32, #tpu.memory_space<vmem>>, vector<32x8xf32>
    %7 = vector.extract_strided_slice %6 {offsets = [0, 0], sizes = [32, 1], strides = [1, 1]} : vector<32x8xf32> to vector<32x1xf32>
    %8 = vector.extract_strided_slice %6 {offsets = [0, 1], sizes = [32, 1], strides = [1, 1]} : vector<32x8xf32> to vector<32x1xf32>
    %9 = vector.extract_strided_slice %6 {offsets = [0, 2], sizes = [32, 1], strides = [1, 1]} : vector<32x8xf32> to vector<32x1xf32>
    %c0_2 = arith.constant 0 : index
    %c0_3 = arith.constant 0 : index
    %10 = vector.load %arg6[%c0_2, %c0_3] : memref<1x32xf32, #tpu.memory_space<vmem>>, vector<1x32xf32>
    %c0_4 = arith.constant 0 : index
    %c0_5 = arith.constant 0 : index
    %11 = vector.load %arg7[%c0_4, %c0_5] : memref<32x8xf32, #tpu.memory_space<vmem>>, vector<32x8xf32>
    %c0_6 = arith.constant 0 : index
    %c0_7 = arith.constant 0 : index
    %c0_8 = arith.constant 0 : index
    %c0_9 = arith.constant 0 : index
    %12 = vector.load %arg3[%c0_6, %c0_7, %c0_8, %c0_9] : memref<1x4x8x128xf32, #tpu.memory_space<vmem>>, vector<1x1x1x128xf32>
    %13 = vector.shape_cast %12 : vector<1x1x1x128xf32> to vector<1x128xf32>
    %c0_10 = arith.constant 0 : index
    %c1_11 = arith.constant 1 : index
    %c0_12 = arith.constant 0 : index
    %c0_13 = arith.constant 0 : index
    %14 = vector.load %arg3[%c0_10, %c1_11, %c0_12, %c0_13] : memref<1x4x8x128xf32, #tpu.memory_space<vmem>>, vector<1x1x1x128xf32>
    %15 = vector.shape_cast %14 : vector<1x1x1x128xf32> to vector<1x128xf32>
    %c0_14 = arith.constant 0 : index
    %c3 = arith.constant 3 : index
    %c0_15 = arith.constant 0 : index
    %c0_16 = arith.constant 0 : index
    %16 = vector.load %arg3[%c0_14, %c3, %c0_15, %c0_16] : memref<1x4x8x128xf32, #tpu.memory_space<vmem>>, vector<1x1x1x128xf32>
    %17 = vector.shape_cast %16 : vector<1x1x1x128xf32> to vector<1x128xf32>
    %18 = vector.broadcast %1 : f32 to vector<1x128xf32>
    %19 = arith.mulf %18, %13 : vector<1x128xf32>
    %20 = vector.broadcast %3 : f32 to vector<1x128xf32>
    %21 = arith.mulf %20, %17 : vector<1x128xf32>
    %22 = arith.addf %19, %21 : vector<1x128xf32>
    %c0_17 = arith.constant 0 : index
    %c0_18 = arith.constant 0 : index
    %c0_19 = arith.constant 0 : index
    %23 = vector.load %arg4[%c0_17, %c0_18, %c0_19] : memref<1x32x128xf32, #tpu.memory_space<vmem>>, vector<1x32x128xf32>
    %24 = vector.shape_cast %23 : vector<1x32x128xf32> to vector<32x128xf32>
    %25 = vector.extract_strided_slice %11 {offsets = [0, 0], sizes = [32, 1], strides = [1, 1]} : vector<32x8xf32> to vector<32x1xf32>
    %26 = vector.broadcast %25 : vector<32x1xf32> to vector<32x128xf32>
    %27 = arith.addf %24, %26 : vector<32x128xf32>
    %28 = arith.mulf %15, %13 : vector<1x128xf32>
    %29 = vector.broadcast %7 : vector<32x1xf32> to vector<32x128xf32>
    %30 = vector.broadcast %28 : vector<1x128xf32> to vector<32x128xf32>
    %31 = arith.mulf %29, %30 : vector<32x128xf32>
    %32 = arith.addf %27, %31 : vector<32x128xf32>
    %cst = arith.constant 1.000000e+00 : f32
    %33 = vector.broadcast %cst : f32 to vector<1x128xf32>
    %34 = arith.subf %33, %15 : vector<1x128xf32>
    %35 = arith.mulf %34, %22 : vector<1x128xf32>
    %36 = vector.broadcast %8 : vector<32x1xf32> to vector<32x128xf32>
    %37 = vector.broadcast %35 : vector<1x128xf32> to vector<32x128xf32>
    %38 = arith.mulf %36, %37 : vector<32x128xf32>
    %39 = arith.addf %32, %38 : vector<32x128xf32>
    %40 = vector.broadcast %9 : vector<32x1xf32> to vector<32x128xf32>
    %41 = vector.broadcast %15 : vector<1x128xf32> to vector<32x128xf32>
    %42 = arith.mulf %40, %41 : vector<32x128xf32>
    %43 = arith.addf %39, %42 : vector<32x128xf32>
    %cst_20 = arith.constant 0.000000e+00 : f32
    %44 = vector.broadcast %cst_20 : f32 to vector<32x128xf32>
    %45 = arith.maximumf %43, %44 : vector<32x128xf32>
    %cst_21 = arith.constant dense<0.000000e+00> : vector<1x128xf32>
    %46 = tpu.matmul %10, %45, %cst_21 {dimension_numbers = #tpu.dot_dimension_numbers<[1], [0], [0], [1], [0, 0, 1, 1], [], []>} : vector<1x32xf32>, vector<32x128xf32>, vector<1x128xf32> -> vector<1x128xf32>
    %47 = vector.broadcast %5 : f32 to vector<1x128xf32>
    %48 = arith.addf %46, %47 : vector<1x128xf32>
    %c0_22 = arith.constant 0 : index
    %c0_23 = arith.constant 0 : index
    %49 = vector.load %arg11[%c0_22, %c0_23] : memref<8x128xf32, #tpu.memory_space<vmem>>, vector<1x128xf32>
    tpu.vector_store %arg11[%c0_22, %c0_23], %48 {strides = array<i32>} : memref<8x128xf32, #tpu.memory_space<vmem>>, vector<1x128xf32>,
    %c0_24 = arith.constant 0 : index
    %c0_25 = arith.constant 0 : index
    %c1_26 = arith.constant 1 : index
    %c0_27 = arith.constant 0 : index
    %50 = vector.load %arg3[%c0_24, %c0_25, %c1_26, %c0_27] : memref<1x4x8x128xf32, #tpu.memory_space<vmem>>, vector<1x1x1x128xf32>
    %51 = vector.shape_cast %50 : vector<1x1x1x128xf32> to vector<1x128xf32>
    %c0_28 = arith.constant 0 : index
    %c1_29 = arith.constant 1 : index
    %c1_30 = arith.constant 1 : index
    %c0_31 = arith.constant 0 : index
    %52 = vector.load %arg3[%c0_28, %c1_29, %c1_30, %c0_31] : memref<1x4x8x128xf32, #tpu.memory_space<vmem>>, vector<1x1x1x128xf32>
    %53 = vector.shape_cast %52 : vector<1x1x1x128xf32> to vector<1x128xf32>
    %c0_32 = arith.constant 0 : index
    %c3_33 = arith.constant 3 : index
    %c1_34 = arith.constant 1 : index
    %c0_35 = arith.constant 0 : index
    %54 = vector.load %arg3[%c0_32, %c3_33, %c1_34, %c0_35] : memref<1x4x8x128xf32, #tpu.memory_space<vmem>>, vector<1x1x1x128xf32>
    %55 = vector.shape_cast %54 : vector<1x1x1x128xf32> to vector<1x128xf32>
    %56 = vector.broadcast %1 : f32 to vector<1x128xf32>
    %57 = arith.mulf %56, %51 : vector<1x128xf32>
    %58 = vector.broadcast %3 : f32 to vector<1x128xf32>
    %59 = arith.mulf %58, %55 : vector<1x128xf32>
    %60 = arith.addf %57, %59 : vector<1x128xf32>
    %c0_36 = arith.constant 0 : index
    %c0_37 = arith.constant 0 : index
    %c0_38 = arith.constant 0 : index
    %61 = vector.load %arg4[%c0_36, %c0_37, %c0_38] : memref<1x32x128xf32, #tpu.memory_space<vmem>>, vector<1x32x128xf32>
    %62 = vector.shape_cast %61 : vector<1x32x128xf32> to vector<32x128xf32>
    %63 = vector.extract_strided_slice %11 {offsets = [0, 1], sizes = [32, 1], strides = [1, 1]} : vector<32x8xf32> to vector<32x1xf32>
    %64 = vector.broadcast %63 : vector<32x1xf32> to vector<32x128xf32>
    %65 = arith.addf %62, %64 : vector<32x128xf32>
    %66 = arith.mulf %53, %51 : vector<1x128xf32>
    %67 = vector.broadcast %7 : vector<32x1xf32> to vector<32x128xf32>
    %68 = vector.broadcast %66 : vector<1x128xf32> to vector<32x128xf32>
    %69 = arith.mulf %67, %68 : vector<32x128xf32>
    %70 = arith.addf %65, %69 : vector<32x128xf32>
    %cst_39 = arith.constant 1.000000e+00 : f32
    %71 = vector.broadcast %cst_39 : f32 to vector<1x128xf32>
    %72 = arith.subf %71, %53 : vector<1x128xf32>
    %73 = arith.mulf %72, %60 : vector<1x128xf32>
    %74 = vector.broadcast %8 : vector<32x1xf32> to vector<32x128xf32>
    %75 = vector.broadcast %73 : vector<1x128xf32> to vector<32x128xf32>
    %76 = arith.mulf %74, %75 : vector<32x128xf32>
    %77 = arith.addf %70, %76 : vector<32x128xf32>
    %78 = vector.broadcast %9 : vector<32x1xf32> to vector<32x128xf32>
    %79 = vector.broadcast %53 : vector<1x128xf32> to vector<32x128xf32>
    %80 = arith.mulf %78, %79 : vector<32x128xf32>
    %81 = arith.addf %77, %80 : vector<32x128xf32>
    %cst_40 = arith.constant 0.000000e+00 : f32
    %82 = vector.broadcast %cst_40 : f32 to vector<32x128xf32>
    %83 = arith.maximumf %81, %82 : vector<32x128xf32>
    %cst_41 = arith.constant dense<0.000000e+00> : vector<1x128xf32>
    %84 = tpu.matmul %10, %83, %cst_41 {dimension_numbers = #tpu.dot_dimension_numbers<[1], [0], [0], [1], [0, 0, 1, 1], [], []>} : vector<1x32xf32>, vector<32x128xf32>, vector<1x128xf32> -> vector<1x128xf32>
    %85 = vector.broadcast %5 : f32 to vector<1x128xf32>
    %86 = arith.addf %84, %85 : vector<1x128xf32>
    %c1_42 = arith.constant 1 : index
    %c0_43 = arith.constant 0 : index
    %87 = vector.load %arg11[%c1_42, %c0_43] : memref<8x128xf32, #tpu.memory_space<vmem>>, vector<1x128xf32>
    tpu.vector_store %arg11[%c1_42, %c0_43], %86 {strides = array<i32>} : memref<8x128xf32, #tpu.memory_space<vmem>>, vector<1x128xf32>,
    %c0_44 = arith.constant 0 : index
    %c0_45 = arith.constant 0 : index
    %c2_46 = arith.constant 2 : index
    %c0_47 = arith.constant 0 : index
    %88 = vector.load %arg3[%c0_44, %c0_45, %c2_46, %c0_47] : memref<1x4x8x128xf32, #tpu.memory_space<vmem>>, vector<1x1x1x128xf32>
    %89 = vector.shape_cast %88 : vector<1x1x1x128xf32> to vector<1x128xf32>
    %c0_48 = arith.constant 0 : index
    %c1_49 = arith.constant 1 : index
    %c2_50 = arith.constant 2 : index
    %c0_51 = arith.constant 0 : index
    %90 = vector.load %arg3[%c0_48, %c1_49, %c2_50, %c0_51] : memref<1x4x8x128xf32, #tpu.memory_space<vmem>>, vector<1x1x1x128xf32>
    %91 = vector.shape_cast %90 : vector<1x1x1x128xf32> to vector<1x128xf32>
    %c0_52 = arith.constant 0 : index
    %c3_53 = arith.constant 3 : index
    %c2_54 = arith.constant 2 : index
    %c0_55 = arith.constant 0 : index
    %92 = vector.load %arg3[%c0_52, %c3_53, %c2_54, %c0_55] : memref<1x4x8x128xf32, #tpu.memory_space<vmem>>, vector<1x1x1x128xf32>
    %93 = vector.shape_cast %92 : vector<1x1x1x128xf32> to vector<1x128xf32>
    %94 = vector.broadcast %1 : f32 to vector<1x128xf32>
    %95 = arith.mulf %94, %89 : vector<1x128xf32>
    %96 = vector.broadcast %3 : f32 to vector<1x128xf32>
    %97 = arith.mulf %96, %93 : vector<1x128xf32>
    %98 = arith.addf %95, %97 : vector<1x128xf32>
    %c0_56 = arith.constant 0 : index
    %c0_57 = arith.constant 0 : index
    %c0_58 = arith.constant 0 : index
    %99 = vector.load %arg4[%c0_56, %c0_57, %c0_58] : memref<1x32x128xf32, #tpu.memory_space<vmem>>, vector<1x32x128xf32>
    %100 = vector.shape_cast %99 : vector<1x32x128xf32> to vector<32x128xf32>
    %101 = vector.extract_strided_slice %11 {offsets = [0, 2], sizes = [32, 1], strides = [1, 1]} : vector<32x8xf32> to vector<32x1xf32>
    %102 = vector.broadcast %101 : vector<32x1xf32> to vector<32x128xf32>
    %103 = arith.addf %100, %102 : vector<32x128xf32>
    %104 = arith.mulf %91, %89 : vector<1x128xf32>
    %105 = vector.broadcast %7 : vector<32x1xf32> to vector<32x128xf32>
    %106 = vector.broadcast %104 : vector<1x128xf32> to vector<32x128xf32>
    %107 = arith.mulf %105, %106 : vector<32x128xf32>
    %108 = arith.addf %103, %107 : vector<32x128xf32>
    %cst_59 = arith.constant 1.000000e+00 : f32
    %109 = vector.broadcast %cst_59 : f32 to vector<1x128xf32>
    %110 = arith.subf %109, %91 : vector<1x128xf32>
    %111 = arith.mulf %110, %98 : vector<1x128xf32>
    %112 = vector.broadcast %8 : vector<32x1xf32> to vector<32x128xf32>
    %113 = vector.broadcast %111 : vector<1x128xf32> to vector<32x128xf32>
    %114 = arith.mulf %112, %113 : vector<32x128xf32>
    %115 = arith.addf %108, %114 : vector<32x128xf32>
    %116 = vector.broadcast %9 : vector<32x1xf32> to vector<32x128xf32>
    %117 = vector.broadcast %91 : vector<1x128xf32> to vector<32x128xf32>
    %118 = arith.mulf %116, %117 : vector<32x128xf32>
    %119 = arith.addf %115, %118 : vector<32x128xf32>
    %cst_60 = arith.constant 0.000000e+00 : f32
    %120 = vector.broadcast %cst_60 : f32 to vector<32x128xf32>
    %121 = arith.maximumf %119, %120 : vector<32x128xf32>
    %cst_61 = arith.constant dense<0.000000e+00> : vector<1x128xf32>
    %122 = tpu.matmul %10, %121, %cst_61 {dimension_numbers = #tpu.dot_dimension_numbers<[1], [0], [0], [1], [0, 0, 1, 1], [], []>} : vector<1x32xf32>, vector<32x128xf32>, vector<1x128xf32> -> vector<1x128xf32>
    %123 = vector.broadcast %5 : f32 to vector<1x128xf32>
    %124 = arith.addf %122, %123 : vector<1x128xf32>
    %c2_62 = arith.constant 2 : index
    %c0_63 = arith.constant 0 : index
    %125 = vector.load %arg11[%c2_62, %c0_63] : memref<8x128xf32, #tpu.memory_space<vmem>>, vector<1x128xf32>
    tpu.vector_store %arg11[%c2_62, %c0_63], %124 {strides = array<i32>} : memref<8x128xf32, #tpu.memory_space<vmem>>, vector<1x128xf32>,
    %c0_64 = arith.constant 0 : index
    %c0_65 = arith.constant 0 : index
    %c3_66 = arith.constant 3 : index
    %c0_67 = arith.constant 0 : index
    %126 = vector.load %arg3[%c0_64, %c0_65, %c3_66, %c0_67] : memref<1x4x8x128xf32, #tpu.memory_space<vmem>>, vector<1x1x1x128xf32>
    %127 = vector.shape_cast %126 : vector<1x1x1x128xf32> to vector<1x128xf32>
    %c0_68 = arith.constant 0 : index
    %c1_69 = arith.constant 1 : index
    %c3_70 = arith.constant 3 : index
    %c0_71 = arith.constant 0 : index
    %128 = vector.load %arg3[%c0_68, %c1_69, %c3_70, %c0_71] : memref<1x4x8x128xf32, #tpu.memory_space<vmem>>, vector<1x1x1x128xf32>
    %129 = vector.shape_cast %128 : vector<1x1x1x128xf32> to vector<1x128xf32>
    %c0_72 = arith.constant 0 : index
    %c3_73 = arith.constant 3 : index
    %c3_74 = arith.constant 3 : index
    %c0_75 = arith.constant 0 : index
    %130 = vector.load %arg3[%c0_72, %c3_73, %c3_74, %c0_75] : memref<1x4x8x128xf32, #tpu.memory_space<vmem>>, vector<1x1x1x128xf32>
    %131 = vector.shape_cast %130 : vector<1x1x1x128xf32> to vector<1x128xf32>
    %132 = vector.broadcast %1 : f32 to vector<1x128xf32>
    %133 = arith.mulf %132, %127 : vector<1x128xf32>
    %134 = vector.broadcast %3 : f32 to vector<1x128xf32>
    %135 = arith.mulf %134, %131 : vector<1x128xf32>
    %136 = arith.addf %133, %135 : vector<1x128xf32>
    %c0_76 = arith.constant 0 : index
    %c0_77 = arith.constant 0 : index
    %c0_78 = arith.constant 0 : index
    %137 = vector.load %arg4[%c0_76, %c0_77, %c0_78] : memref<1x32x128xf32, #tpu.memory_space<vmem>>, vector<1x32x128xf32>
    %138 = vector.shape_cast %137 : vector<1x32x128xf32> to vector<32x128xf32>
    %139 = vector.extract_strided_slice %11 {offsets = [0, 3], sizes = [32, 1], strides = [1, 1]} : vector<32x8xf32> to vector<32x1xf32>
    %140 = vector.broadcast %139 : vector<32x1xf32> to vector<32x128xf32>
    %141 = arith.addf %138, %140 : vector<32x128xf32>
    %142 = arith.mulf %129, %127 : vector<1x128xf32>
    %143 = vector.broadcast %7 : vector<32x1xf32> to vector<32x128xf32>
    %144 = vector.broadcast %142 : vector<1x128xf32> to vector<32x128xf32>
    %145 = arith.mulf %143, %144 : vector<32x128xf32>
    %146 = arith.addf %141, %145 : vector<32x128xf32>
    %cst_79 = arith.constant 1.000000e+00 : f32
    %147 = vector.broadcast %cst_79 : f32 to vector<1x128xf32>
    %148 = arith.subf %147, %129 : vector<1x128xf32>
    %149 = arith.mulf %148, %136 : vector<1x128xf32>
    %150 = vector.broadcast %8 : vector<32x1xf32> to vector<32x128xf32>
    %151 = vector.broadcast %149 : vector<1x128xf32> to vector<32x128xf32>
    %152 = arith.mulf %150, %151 : vector<32x128xf32>
    %153 = arith.addf %146, %152 : vector<32x128xf32>
    %154 = vector.broadcast %9 : vector<32x1xf32> to vector<32x128xf32>
    %155 = vector.broadcast %129 : vector<1x128xf32> to vector<32x128xf32>
    %156 = arith.mulf %154, %155 : vector<32x128xf32>
    %157 = arith.addf %153, %156 : vector<32x128xf32>
    %cst_80 = arith.constant 0.000000e+00 : f32
    %158 = vector.broadcast %cst_80 : f32 to vector<32x128xf32>
    %159 = arith.maximumf %157, %158 : vector<32x128xf32>
    %cst_81 = arith.constant dense<0.000000e+00> : vector<1x128xf32>
    %160 = tpu.matmul %10, %159, %cst_81 {dimension_numbers = #tpu.dot_dimension_numbers<[1], [0], [0], [1], [0, 0, 1, 1], [], []>} : vector<1x32xf32>, vector<32x128xf32>, vector<1x128xf32> -> vector<1x128xf32>
    %161 = vector.broadcast %5 : f32 to vector<1x128xf32>
    %162 = arith.addf %160, %161 : vector<1x128xf32>
    %c3_82 = arith.constant 3 : index
    %c0_83 = arith.constant 0 : index
    %163 = vector.load %arg11[%c3_82, %c0_83] : memref<8x128xf32, #tpu.memory_space<vmem>>, vector<1x128xf32>
    tpu.vector_store %arg11[%c3_82, %c0_83], %162 {strides = array<i32>} : memref<8x128xf32, #tpu.memory_space<vmem>>, vector<1x128xf32>,
    %c0_84 = arith.constant 0 : index
    %c0_85 = arith.constant 0 : index
    %c4 = arith.constant 4 : index
    %c0_86 = arith.constant 0 : index
    %164 = vector.load %arg3[%c0_84, %c0_85, %c4, %c0_86] : memref<1x4x8x128xf32, #tpu.memory_space<vmem>>, vector<1x1x1x128xf32>
    %165 = vector.shape_cast %164 : vector<1x1x1x128xf32> to vector<1x128xf32>
    %c0_87 = arith.constant 0 : index
    %c1_88 = arith.constant 1 : index
    %c4_89 = arith.constant 4 : index
    %c0_90 = arith.constant 0 : index
    %166 = vector.load %arg3[%c0_87, %c1_88, %c4_89, %c0_90] : memref<1x4x8x128xf32, #tpu.memory_space<vmem>>, vector<1x1x1x128xf32>
    %167 = vector.shape_cast %166 : vector<1x1x1x128xf32> to vector<1x128xf32>
    %c0_91 = arith.constant 0 : index
    %c3_92 = arith.constant 3 : index
    %c4_93 = arith.constant 4 : index
    %c0_94 = arith.constant 0 : index
    %168 = vector.load %arg3[%c0_91, %c3_92, %c4_93, %c0_94] : memref<1x4x8x128xf32, #tpu.memory_space<vmem>>, vector<1x1x1x128xf32>
    %169 = vector.shape_cast %168 : vector<1x1x1x128xf32> to vector<1x128xf32>
    %170 = vector.broadcast %1 : f32 to vector<1x128xf32>
    %171 = arith.mulf %170, %165 : vector<1x128xf32>
    %172 = vector.broadcast %3 : f32 to vector<1x128xf32>
    %173 = arith.mulf %172, %169 : vector<1x128xf32>
    %174 = arith.addf %171, %173 : vector<1x128xf32>
    %c0_95 = arith.constant 0 : index
    %c0_96 = arith.constant 0 : index
    %c0_97 = arith.constant 0 : index
    %175 = vector.load %arg4[%c0_95, %c0_96, %c0_97] : memref<1x32x128xf32, #tpu.memory_space<vmem>>, vector<1x32x128xf32>
    %176 = vector.shape_cast %175 : vector<1x32x128xf32> to vector<32x128xf32>
    %177 = vector.extract_strided_slice %11 {offsets = [0, 4], sizes = [32, 1], strides = [1, 1]} : vector<32x8xf32> to vector<32x1xf32>
    %178 = vector.broadcast %177 : vector<32x1xf32> to vector<32x128xf32>
    %179 = arith.addf %176, %178 : vector<32x128xf32>
    %180 = arith.mulf %167, %165 : vector<1x128xf32>
    %181 = vector.broadcast %7 : vector<32x1xf32> to vector<32x128xf32>
    %182 = vector.broadcast %180 : vector<1x128xf32> to vector<32x128xf32>
    %183 = arith.mulf %181, %182 : vector<32x128xf32>
    %184 = arith.addf %179, %183 : vector<32x128xf32>
    %cst_98 = arith.constant 1.000000e+00 : f32
    %185 = vector.broadcast %cst_98 : f32 to vector<1x128xf32>
    %186 = arith.subf %185, %167 : vector<1x128xf32>
    %187 = arith.mulf %186, %174 : vector<1x128xf32>
    %188 = vector.broadcast %8 : vector<32x1xf32> to vector<32x128xf32>
    %189 = vector.broadcast %187 : vector<1x128xf32> to vector<32x128xf32>
    %190 = arith.mulf %188, %189 : vector<32x128xf32>
    %191 = arith.addf %184, %190 : vector<32x128xf32>
    %192 = vector.broadcast %9 : vector<32x1xf32> to vector<32x128xf32>
    %193 = vector.broadcast %167 : vector<1x128xf32> to vector<32x128xf32>
    %194 = arith.mulf %192, %193 : vector<32x128xf32>
    %195 = arith.addf %191, %194 : vector<32x128xf32>
    %cst_99 = arith.constant 0.000000e+00 : f32
    %196 = vector.broadcast %cst_99 : f32 to vector<32x128xf32>
    %197 = arith.maximumf %195, %196 : vector<32x128xf32>
    %cst_100 = arith.constant dense<0.000000e+00> : vector<1x128xf32>
    %198 = tpu.matmul %10, %197, %cst_100 {dimension_numbers = #tpu.dot_dimension_numbers<[1], [0], [0], [1], [0, 0, 1, 1], [], []>} : vector<1x32xf32>, vector<32x128xf32>, vector<1x128xf32> -> vector<1x128xf32>
    %199 = vector.broadcast %5 : f32 to vector<1x128xf32>
    %200 = arith.addf %198, %199 : vector<1x128xf32>
    %c4_101 = arith.constant 4 : index
    %c0_102 = arith.constant 0 : index
    %201 = vector.load %arg11[%c4_101, %c0_102] : memref<8x128xf32, #tpu.memory_space<vmem>>, vector<1x128xf32>
    tpu.vector_store %arg11[%c4_101, %c0_102], %200 {strides = array<i32>} : memref<8x128xf32, #tpu.memory_space<vmem>>, vector<1x128xf32>,
    %c0_103 = arith.constant 0 : index
    %c0_104 = arith.constant 0 : index
    %c5 = arith.constant 5 : index
    %c0_105 = arith.constant 0 : index
    %202 = vector.load %arg3[%c0_103, %c0_104, %c5, %c0_105] : memref<1x4x8x128xf32, #tpu.memory_space<vmem>>, vector<1x1x1x128xf32>
    %203 = vector.shape_cast %202 : vector<1x1x1x128xf32> to vector<1x128xf32>
    %c0_106 = arith.constant 0 : index
    %c1_107 = arith.constant 1 : index
    %c5_108 = arith.constant 5 : index
    %c0_109 = arith.constant 0 : index
    %204 = vector.load %arg3[%c0_106, %c1_107, %c5_108, %c0_109] : memref<1x4x8x128xf32, #tpu.memory_space<vmem>>, vector<1x1x1x128xf32>
    %205 = vector.shape_cast %204 : vector<1x1x1x128xf32> to vector<1x128xf32>
    %c0_110 = arith.constant 0 : index
    %c3_111 = arith.constant 3 : index
    %c5_112 = arith.constant 5 : index
    %c0_113 = arith.constant 0 : index
    %206 = vector.load %arg3[%c0_110, %c3_111, %c5_112, %c0_113] : memref<1x4x8x128xf32, #tpu.memory_space<vmem>>, vector<1x1x1x128xf32>
    %207 = vector.shape_cast %206 : vector<1x1x1x128xf32> to vector<1x128xf32>
    %208 = vector.broadcast %1 : f32 to vector<1x128xf32>
    %209 = arith.mulf %208, %203 : vector<1x128xf32>
    %210 = vector.broadcast %3 : f32 to vector<1x128xf32>
    %211 = arith.mulf %210, %207 : vector<1x128xf32>
    %212 = arith.addf %209, %211 : vector<1x128xf32>
    %c0_114 = arith.constant 0 : index
    %c0_115 = arith.constant 0 : index
    %c0_116 = arith.constant 0 : index
    %213 = vector.load %arg4[%c0_114, %c0_115, %c0_116] : memref<1x32x128xf32, #tpu.memory_space<vmem>>, vector<1x32x128xf32>
    %214 = vector.shape_cast %213 : vector<1x32x128xf32> to vector<32x128xf32>
    %215 = vector.extract_strided_slice %11 {offsets = [0, 5], sizes = [32, 1], strides = [1, 1]} : vector<32x8xf32> to vector<32x1xf32>
    %216 = vector.broadcast %215 : vector<32x1xf32> to vector<32x128xf32>
    %217 = arith.addf %214, %216 : vector<32x128xf32>
    %218 = arith.mulf %205, %203 : vector<1x128xf32>
    %219 = vector.broadcast %7 : vector<32x1xf32> to vector<32x128xf32>
    %220 = vector.broadcast %218 : vector<1x128xf32> to vector<32x128xf32>
    %221 = arith.mulf %219, %220 : vector<32x128xf32>
    %222 = arith.addf %217, %221 : vector<32x128xf32>
    %cst_117 = arith.constant 1.000000e+00 : f32
    %223 = vector.broadcast %cst_117 : f32 to vector<1x128xf32>
    %224 = arith.subf %223, %205 : vector<1x128xf32>
    %225 = arith.mulf %224, %212 : vector<1x128xf32>
    %226 = vector.broadcast %8 : vector<32x1xf32> to vector<32x128xf32>
    %227 = vector.broadcast %225 : vector<1x128xf32> to vector<32x128xf32>
    %228 = arith.mulf %226, %227 : vector<32x128xf32>
    %229 = arith.addf %222, %228 : vector<32x128xf32>
    %230 = vector.broadcast %9 : vector<32x1xf32> to vector<32x128xf32>
    %231 = vector.broadcast %205 : vector<1x128xf32> to vector<32x128xf32>
    %232 = arith.mulf %230, %231 : vector<32x128xf32>
    %233 = arith.addf %229, %232 : vector<32x128xf32>
    %cst_118 = arith.constant 0.000000e+00 : f32
    %234 = vector.broadcast %cst_118 : f32 to vector<32x128xf32>
    %235 = arith.maximumf %233, %234 : vector<32x128xf32>
    %cst_119 = arith.constant dense<0.000000e+00> : vector<1x128xf32>
    %236 = tpu.matmul %10, %235, %cst_119 {dimension_numbers = #tpu.dot_dimension_numbers<[1], [0], [0], [1], [0, 0, 1, 1], [], []>} : vector<1x32xf32>, vector<32x128xf32>, vector<1x128xf32> -> vector<1x128xf32>
    %237 = vector.broadcast %5 : f32 to vector<1x128xf32>
    %238 = arith.addf %236, %237 : vector<1x128xf32>
    %c5_120 = arith.constant 5 : index
    %c0_121 = arith.constant 0 : index
    %239 = vector.load %arg11[%c5_120, %c0_121] : memref<8x128xf32, #tpu.memory_space<vmem>>, vector<1x128xf32>
    tpu.vector_store %arg11[%c5_120, %c0_121], %238 {strides = array<i32>} : memref<8x128xf32, #tpu.memory_space<vmem>>, vector<1x128xf32>,
    %c0_122 = arith.constant 0 : index
    %c0_123 = arith.constant 0 : index
    %c6 = arith.constant 6 : index
    %c0_124 = arith.constant 0 : index
    %240 = vector.load %arg3[%c0_122, %c0_123, %c6, %c0_124] : memref<1x4x8x128xf32, #tpu.memory_space<vmem>>, vector<1x1x1x128xf32>
    %241 = vector.shape_cast %240 : vector<1x1x1x128xf32> to vector<1x128xf32>
    %c0_125 = arith.constant 0 : index
    %c1_126 = arith.constant 1 : index
    %c6_127 = arith.constant 6 : index
    %c0_128 = arith.constant 0 : index
    %242 = vector.load %arg3[%c0_125, %c1_126, %c6_127, %c0_128] : memref<1x4x8x128xf32, #tpu.memory_space<vmem>>, vector<1x1x1x128xf32>
    %243 = vector.shape_cast %242 : vector<1x1x1x128xf32> to vector<1x128xf32>
    %c0_129 = arith.constant 0 : index
    %c3_130 = arith.constant 3 : index
    %c6_131 = arith.constant 6 : index
    %c0_132 = arith.constant 0 : index
    %244 = vector.load %arg3[%c0_129, %c3_130, %c6_131, %c0_132] : memref<1x4x8x128xf32, #tpu.memory_space<vmem>>, vector<1x1x1x128xf32>
    %245 = vector.shape_cast %244 : vector<1x1x1x128xf32> to vector<1x128xf32>
    %246 = vector.broadcast %1 : f32 to vector<1x128xf32>
    %247 = arith.mulf %246, %241 : vector<1x128xf32>
    %248 = vector.broadcast %3 : f32 to vector<1x128xf32>
    %249 = arith.mulf %248, %245 : vector<1x128xf32>
    %250 = arith.addf %247, %249 : vector<1x128xf32>
    %c0_133 = arith.constant 0 : index
    %c0_134 = arith.constant 0 : index
    %c0_135 = arith.constant 0 : index
    %251 = vector.load %arg4[%c0_133, %c0_134, %c0_135] : memref<1x32x128xf32, #tpu.memory_space<vmem>>, vector<1x32x128xf32>
    %252 = vector.shape_cast %251 : vector<1x32x128xf32> to vector<32x128xf32>
    %253 = vector.extract_strided_slice %11 {offsets = [0, 6], sizes = [32, 1], strides = [1, 1]} : vector<32x8xf32> to vector<32x1xf32>
    %254 = vector.broadcast %253 : vector<32x1xf32> to vector<32x128xf32>
    %255 = arith.addf %252, %254 : vector<32x128xf32>
    %256 = arith.mulf %243, %241 : vector<1x128xf32>
    %257 = vector.broadcast %7 : vector<32x1xf32> to vector<32x128xf32>
    %258 = vector.broadcast %256 : vector<1x128xf32> to vector<32x128xf32>
    %259 = arith.mulf %257, %258 : vector<32x128xf32>
    %260 = arith.addf %255, %259 : vector<32x128xf32>
    %cst_136 = arith.constant 1.000000e+00 : f32
    %261 = vector.broadcast %cst_136 : f32 to vector<1x128xf32>
    %262 = arith.subf %261, %243 : vector<1x128xf32>
    %263 = arith.mulf %262, %250 : vector<1x128xf32>
    %264 = vector.broadcast %8 : vector<32x1xf32> to vector<32x128xf32>
    %265 = vector.broadcast %263 : vector<1x128xf32> to vector<32x128xf32>
    %266 = arith.mulf %264, %265 : vector<32x128xf32>
    %267 = arith.addf %260, %266 : vector<32x128xf32>
    %268 = vector.broadcast %9 : vector<32x1xf32> to vector<32x128xf32>
    %269 = vector.broadcast %243 : vector<1x128xf32> to vector<32x128xf32>
    %270 = arith.mulf %268, %269 : vector<32x128xf32>
    %271 = arith.addf %267, %270 : vector<32x128xf32>
    %cst_137 = arith.constant 0.000000e+00 : f32
    %272 = vector.broadcast %cst_137 : f32 to vector<32x128xf32>
    %273 = arith.maximumf %271, %272 : vector<32x128xf32>
    %cst_138 = arith.constant dense<0.000000e+00> : vector<1x128xf32>
    %274 = tpu.matmul %10, %273, %cst_138 {dimension_numbers = #tpu.dot_dimension_numbers<[1], [0], [0], [1], [0, 0, 1, 1], [], []>} : vector<1x32xf32>, vector<32x128xf32>, vector<1x128xf32> -> vector<1x128xf32>
    %275 = vector.broadcast %5 : f32 to vector<1x128xf32>
    %276 = arith.addf %274, %275 : vector<1x128xf32>
    %c6_139 = arith.constant 6 : index
    %c0_140 = arith.constant 0 : index
    %277 = vector.load %arg11[%c6_139, %c0_140] : memref<8x128xf32, #tpu.memory_space<vmem>>, vector<1x128xf32>
    tpu.vector_store %arg11[%c6_139, %c0_140], %276 {strides = array<i32>} : memref<8x128xf32, #tpu.memory_space<vmem>>, vector<1x128xf32>,
    %c0_141 = arith.constant 0 : index
    %c0_142 = arith.constant 0 : index
    %c7 = arith.constant 7 : index
    %c0_143 = arith.constant 0 : index
    %278 = vector.load %arg3[%c0_141, %c0_142, %c7, %c0_143] : memref<1x4x8x128xf32, #tpu.memory_space<vmem>>, vector<1x1x1x128xf32>
    %279 = vector.shape_cast %278 : vector<1x1x1x128xf32> to vector<1x128xf32>
    %c0_144 = arith.constant 0 : index
    %c1_145 = arith.constant 1 : index
    %c7_146 = arith.constant 7 : index
    %c0_147 = arith.constant 0 : index
    %280 = vector.load %arg3[%c0_144, %c1_145, %c7_146, %c0_147] : memref<1x4x8x128xf32, #tpu.memory_space<vmem>>, vector<1x1x1x128xf32>
    %281 = vector.shape_cast %280 : vector<1x1x1x128xf32> to vector<1x128xf32>
    %c0_148 = arith.constant 0 : index
    %c3_149 = arith.constant 3 : index
    %c7_150 = arith.constant 7 : index
    %c0_151 = arith.constant 0 : index
    %282 = vector.load %arg3[%c0_148, %c3_149, %c7_150, %c0_151] : memref<1x4x8x128xf32, #tpu.memory_space<vmem>>, vector<1x1x1x128xf32>
    %283 = vector.shape_cast %282 : vector<1x1x1x128xf32> to vector<1x128xf32>
    %284 = vector.broadcast %1 : f32 to vector<1x128xf32>
    %285 = arith.mulf %284, %279 : vector<1x128xf32>
    %286 = vector.broadcast %3 : f32 to vector<1x128xf32>
    %287 = arith.mulf %286, %283 : vector<1x128xf32>
    %288 = arith.addf %285, %287 : vector<1x128xf32>
    %c0_152 = arith.constant 0 : index
    %c0_153 = arith.constant 0 : index
    %c0_154 = arith.constant 0 : index
    %289 = vector.load %arg4[%c0_152, %c0_153, %c0_154] : memref<1x32x128xf32, #tpu.memory_space<vmem>>, vector<1x32x128xf32>
    %290 = vector.shape_cast %289 : vector<1x32x128xf32> to vector<32x128xf32>
    %291 = vector.extract_strided_slice %11 {offsets = [0, 7], sizes = [32, 1], strides = [1, 1]} : vector<32x8xf32> to vector<32x1xf32>
    %292 = vector.broadcast %291 : vector<32x1xf32> to vector<32x128xf32>
    %293 = arith.addf %290, %292 : vector<32x128xf32>
    %294 = arith.mulf %281, %279 : vector<1x128xf32>
    %295 = vector.broadcast %7 : vector<32x1xf32> to vector<32x128xf32>
    %296 = vector.broadcast %294 : vector<1x128xf32> to vector<32x128xf32>
    %297 = arith.mulf %295, %296 : vector<32x128xf32>
    %298 = arith.addf %293, %297 : vector<32x128xf32>
    %cst_155 = arith.constant 1.000000e+00 : f32
    %299 = vector.broadcast %cst_155 : f32 to vector<1x128xf32>
    %300 = arith.subf %299, %281 : vector<1x128xf32>
    %301 = arith.mulf %300, %288 : vector<1x128xf32>
    %302 = vector.broadcast %8 : vector<32x1xf32> to vector<32x128xf32>
    %303 = vector.broadcast %301 : vector<1x128xf32> to vector<32x128xf32>
    %304 = arith.mulf %302, %303 : vector<32x128xf32>
    %305 = arith.addf %298, %304 : vector<32x128xf32>
    %306 = vector.broadcast %9 : vector<32x1xf32> to vector<32x128xf32>
    %307 = vector.broadcast %281 : vector<1x128xf32> to vector<32x128xf32>
    %308 = arith.mulf %306, %307 : vector<32x128xf32>
    %309 = arith.addf %305, %308 : vector<32x128xf32>
    %cst_156 = arith.constant 0.000000e+00 : f32
    %310 = vector.broadcast %cst_156 : f32 to vector<32x128xf32>
    %311 = arith.maximumf %309, %310 : vector<32x128xf32>
    %cst_157 = arith.constant dense<0.000000e+00> : vector<1x128xf32>
    %312 = tpu.matmul %10, %311, %cst_157 {dimension_numbers = #tpu.dot_dimension_numbers<[1], [0], [0], [1], [0, 0, 1, 1], [], []>} : vector<1x32xf32>, vector<32x128xf32>, vector<1x128xf32> -> vector<1x128xf32>
    %313 = vector.broadcast %5 : f32 to vector<1x128xf32>
    %314 = arith.addf %312, %313 : vector<1x128xf32>
    %c7_158 = arith.constant 7 : index
    %c0_159 = arith.constant 0 : index
    %315 = vector.load %arg11[%c7_158, %c0_159] : memref<8x128xf32, #tpu.memory_space<vmem>>, vector<1x128xf32>
    tpu.vector_store %arg11[%c7_158, %c0_159], %314 {strides = array<i32>} : memref<8x128xf32, #tpu.memory_space<vmem>>, vector<1x128xf32>,
    %c0_160 = arith.constant 0 : index
    %c0_161 = arith.constant 0 : index
    %316 = vector.load %arg8[%c0_160, %c0_161] : memref<8x8xf32, #tpu.memory_space<vmem>>, vector<8x8xf32>
    %c0_162 = arith.constant 0 : index
    %c0_163 = arith.constant 0 : index
    %317 = vector.load %arg11[%c0_162, %c0_163] : memref<8x128xf32, #tpu.memory_space<vmem>>, vector<8x128xf32>
    %cst_164 = arith.constant dense<0.000000e+00> : vector<8x128xf32>
    %318 = tpu.matmul %316, %317, %cst_164 {dimension_numbers = #tpu.dot_dimension_numbers<[1], [0], [0], [1], [0, 0, 1, 1], [], []>} : vector<8x8xf32>, vector<8x128xf32>, vector<8x128xf32> -> vector<8x128xf32>
    %c0_165 = arith.constant 0 : index
    %c1_166 = arith.constant 1 : index
    %c0_167 = arith.constant 0 : index
    %c0_168 = arith.constant 0 : index
    %319 = vector.load %arg3[%c0_165, %c1_166, %c0_167, %c0_168] : memref<1x4x8x128xf32, #tpu.memory_space<vmem>>, vector<1x1x8x128xf32>
    %320 = vector.shape_cast %319 : vector<1x1x8x128xf32> to vector<8x128xf32>
    %c0_169 = arith.constant 0 : index
    %c2_170 = arith.constant 2 : index
    %c0_171 = arith.constant 0 : index
    %c0_172 = arith.constant 0 : index
    %321 = vector.load %arg3[%c0_169, %c2_170, %c0_171, %c0_172] : memref<1x4x8x128xf32, #tpu.memory_space<vmem>>, vector<1x1x8x128xf32>
    %322 = vector.shape_cast %321 : vector<1x1x8x128xf32> to vector<8x128xf32>
    %c0_173 = arith.constant 0 : index
    %c3_174 = arith.constant 3 : index
    %c0_175 = arith.constant 0 : index
    %c0_176 = arith.constant 0 : index
    %323 = vector.load %arg3[%c0_173, %c3_174, %c0_175, %c0_176] : memref<1x4x8x128xf32, #tpu.memory_space<vmem>>, vector<1x1x8x128xf32>
    %324 = vector.shape_cast %323 : vector<1x1x8x128xf32> to vector<8x128xf32>
    %325 = arith.subf %322, %320 : vector<8x128xf32>
    %326 = arith.subf %324, %318 : vector<8x128xf32>
    %327 = arith.mulf %326, %325 : vector<8x128xf32>
    %cst_177 = arith.constant 0.000000e+00 : f32
    %328 = vector.broadcast %cst_177 : f32 to vector<1x1x1x1xf32>
    %329 = arith.mulf %327, %327 : vector<8x128xf32>
    %330 = vector.shape_cast %329 : vector<8x128xf32> to vector<1x8x128xf32>
    %cst_178 = arith.constant dense<0.000000e+00> : vector<1xf32>
    %331 = vector.multi_reduction <add>, %330, %cst_178 [1, 2] : vector<1x8x128xf32> to vector<1xf32>
    %332 = vector.shape_cast %331 : vector<1xf32> to vector<1x1x1xf32>
    %333 = vector.extract %332[0, 0, 0] : f32 from vector<1x1x1xf32>
    %334 = vector.broadcast %333 : f32 to vector<1x1x1x1xf32>
    %335 = arith.addf %328, %334 : vector<1x1x1x1xf32>
    %c0_179 = arith.constant 0 : index
    %c0_180 = arith.constant 0 : index
    %c0_181 = arith.constant 0 : index
    %c0_182 = arith.constant 0 : index
    %336 = vector.load %arg9[%c0_179, %c0_180, %c0_181, %c0_182] : memref<1x1x1x1xf32, #tpu.memory_space<vmem>>, vector<1x1x1x1xf32>
    tpu.vector_store %arg9[%c0_179, %c0_180, %c0_181, %c0_182], %335 {strides = array<i32>} : memref<1x1x1x1xf32, #tpu.memory_space<vmem>>, vector<1x1x1x1xf32>,
    %cst_183 = arith.constant 0.000000e+00 : f32
    %337 = vector.broadcast %cst_183 : f32 to vector<1x1x1x1xf32>
    %338 = vector.shape_cast %325 : vector<8x128xf32> to vector<1x8x128xf32>
    %cst_184 = arith.constant dense<0.000000e+00> : vector<1xf32>
    %339 = vector.multi_reduction <add>, %338, %cst_184 [1, 2] : vector<1x8x128xf32> to vector<1xf32>
    %340 = vector.shape_cast %339 : vector<1xf32> to vector<1x1x1xf32>
    %341 = vector.extract %340[0, 0, 0] : f32 from vector<1x1x1xf32>
    %342 = vector.broadcast %341 : f32 to vector<1x1x1x1xf32>
    %343 = arith.addf %337, %342 : vector<1x1x1x1xf32>
    %c0_185 = arith.constant 0 : index
    %c0_186 = arith.constant 0 : index
    %c0_187 = arith.constant 0 : index
    %c0_188 = arith.constant 0 : index
    %344 = vector.load %arg10[%c0_185, %c0_186, %c0_187, %c0_188] : memref<1x1x1x1xf32, #tpu.memory_space<vmem>>, vector<1x1x1x1xf32>
    tpu.vector_store %arg10[%c0_185, %c0_186, %c0_187, %c0_188], %343 {strides = array<i32>} : memref<1x1x1x1xf32, #tpu.memory_space<vmem>>, vector<1x1x1x1xf32>,
    return
  }
  func.func @transform_0(%arg0: i32, %arg1: i32) -> (i32, i32) {
    %c0_i32 = arith.constant 0 : i32
    %c0_i32_0 = arith.constant 0 : i32
    %c0_i32_1 = arith.constant 0 : i32
    return %c0_i32, %c0_i32_0 : i32, i32
  }
  func.func @transform_1(%arg0: i32, %arg1: i32) -> (i32, i32, i32, i32) {
    %c0_i32 = arith.constant 0 : i32
    %c0_i32_0 = arith.constant 0 : i32
    %c0_i32_1 = arith.constant 0 : i32
    return %arg0, %c0_i32, %c0_i32_0, %arg1 : i32, i32, i32, i32
  }
  func.func @transform_2(%arg0: i32, %arg1: i32) -> (i32, i32, i32) {
    %c0_i32 = arith.constant 0 : i32
    %c0_i32_0 = arith.constant 0 : i32
    return %arg0, %c0_i32, %arg1 : i32, i32, i32
  }
  func.func @transform_3(%arg0: i32, %arg1: i32) -> (i32, i32) {
    %c0_i32 = arith.constant 0 : i32
    %c0_i32_0 = arith.constant 0 : i32
    %c0_i32_1 = arith.constant 0 : i32
    return %c0_i32, %c0_i32_0 : i32, i32
  }
  func.func @transform_4(%arg0: i32, %arg1: i32) -> (i32, i32) {
    %c0_i32 = arith.constant 0 : i32
    %c0_i32_0 = arith.constant 0 : i32
    %c0_i32_1 = arith.constant 0 : i32
    return %c0_i32, %c0_i32_0 : i32, i32
  }
  func.func @transform_5(%arg0: i32, %arg1: i32) -> (i32, i32) {
    %c0_i32 = arith.constant 0 : i32
    %c0_i32_0 = arith.constant 0 : i32
    %c0_i32_1 = arith.constant 0 : i32
    return %c0_i32, %c0_i32_0 : i32, i32
  }
  func.func @transform_6(%arg0: i32, %arg1: i32) -> (i32, i32) {
    %c0_i32 = arith.constant 0 : i32
    %c0_i32_0 = arith.constant 0 : i32
    %c0_i32_1 = arith.constant 0 : i32
    return %c0_i32, %c0_i32_0 : i32, i32
  }
  func.func @transform_7(%arg0: i32, %arg1: i32) -> (i32, i32, i32, i32) {
    %c0_i32 = arith.constant 0 : i32
    %c0_i32_0 = arith.constant 0 : i32
    %c0_i32_1 = arith.constant 0 : i32
    return %arg0, %arg1, %c0_i32, %c0_i32_0 : i32, i32, i32, i32
  }
  func.func @transform_8(%arg0: i32, %arg1: i32) -> (i32, i32, i32, i32) {
    %c0_i32 = arith.constant 0 : i32
    %c0_i32_0 = arith.constant 0 : i32
    %c0_i32_1 = arith.constant 0 : i32
    return %arg0, %arg1, %c0_i32, %c0_i32_0 : i32, i32, i32, i32
  }
}

</mosaic_0001>

<llo_original>
// kernel: tpu_custom_call.1
$region0: #{tpu_custom_call.1}
  #allocation0 [shape = 'u32[]', space=smem, size = 0x4, offset = 0x4, fixed_abs, tag = 'smem constant byte address 0x4 - core index']
  #allocation1 [shape = 'u32[144,128]{1,0:T(1,128)}', space=vmem, size = 0x12000, scoped, tag = 'internal scratch']
  #allocation2 [shape = 'f32[8,128]{1,0:T(8,128)}', space=vmem, size = 0x1000, scoped, tag = 'scratch operand']
  %s0 = inlined_call_operand.vmem [shape: f32[3,2], index: 0, kind: input, shape index: {}]
  %s1 = inlined_call_operand.vmem [shape: f32[2,4,8,128], index: 1, kind: input, shape index: {}]
  %s2 = inlined_call_operand.hbm [shape: f32[2,32,128], index: 2, kind: input, shape index: {}]
  %s3 = inlined_call_operand.vmem [shape: f32[32,8], index: 3, kind: input, shape index: {}]
  %s4 = inlined_call_operand.vmem [shape: f32[1,32], index: 4, kind: input, shape index: {}]
  %s5 = inlined_call_operand.vmem [shape: f32[32,8], index: 5, kind: input, shape index: {}]
  %s6 = inlined_call_operand.vmem [shape: f32[8,8], index: 6, kind: input, shape index: {}]
  %s7 = inlined_call_operand.vmem [shape: f32[2,1,1,1], index: 7, kind: output, shape index: {0}]
  %s8 = inlined_call_operand.vmem [shape: f32[2,1,1,1], index: 8, kind: output, shape index: {1}]
  %9 = xla_tuple %s7, %s8
  %s10 = sld [smem:[#allocation0]]
  $region77: #{tpu_custom_call.1} parent=0
    _
  %s12 = ssub.s32 1, %s10
  %s13 = scalar_select 0, %s12, %s10
  $region1: #{tpu_custom_call.1} parent=0
    #allocation3 [shape = 'u8[2048]{0}', space=smem, size = 0x800, scoped, tag = 'input window, operand 0, single buffered']
    #allocation4 [shape = 's32[2]{0}', space=sflag, size = 0x8, scoped, tag = 'scoped memory for tpu_custom_call.1']
    #allocation5 [shape = 's32[2]{0}', space=sflag, size = 0x8, scoped, tag = 'scoped memory for tpu_custom_call.1']
    #allocation6 [shape = 'u8[32768]{0}', space=vmem, size = 0x8000, scoped, tag = 'input window, operand 2']
    %14 = vsyncpa [#allocation5], 0
    %15 = vsyncpa [#allocation4], 0
    %s16 = scalar_lea.sflag [#allocation4], 1
    %17 = vsyncpa %s16, 0
    loop: start=0, step=1, limit=4
    $region2: #{tpu_custom_call.1} parent=1 // loop_pre_header
      _
    $region3: #{tpu_custom_call.1} parent=1 // loop_header
      %s19 = sphi 0, %s23
      %p20 = scmp.ge.s32.totalorder %s19, 4
      %s26 = sphi 0, %s38
      %s27 = sphi 0, %s34
      %s28 = sphi 0, %s26
      %s29 = sphi 0, %s27
      %s30 = sphi 0, %s28
      %s31 = sphi 0, %s29
      %s39 = sphi 0, %s39
      %s41 = sphi 0, %s39
      %s42 = sphi 0, %s41
      %s56 = sphi 0, %s42
      %s64 = sphi 0, %s66
      %s67 = sphi 0, %s64
      %s68 = sphi 0, %s67
      %s84 = sphi 0, %s68
      %s92 = sphi 0, %s94
      %s95 = sphi 0, %s92
      %s96 = sphi 0, %s95
      %s112 = sphi 0, %s96
      %s116 = sphi 0, %s116
      %s118 = sphi 0, %s116
      %s119 = sphi 0, %s118
      %s133 = sphi 0, %s119
      %s137 = sphi 0, %s137
      %s139 = sphi 0, %s137
      %s140 = sphi 0, %s139
      %s154 = sphi 0, %s140
      %s158 = sphi 0, %s158
      %s160 = sphi 0, %s158
      %s161 = sphi 0, %s160
      %s175 = sphi 0, %s161
      %s179 = sphi 0, %s179
      %s181 = sphi 0, %s179
      %s182 = sphi 0, %s181
      %s196 = sphi 0, %s182
      %s204 = sphi 0, %s206
      %s207 = sphi 0, %s204
      %s208 = sphi 0, %s207
      %s224 = sphi 0, %s208
      %s232 = sphi 0, %s234
      %s235 = sphi 0, %s232
      %s236 = sphi 0, %s235
      %s252 = sphi 0, %s236
    $region4: #{tpu_custom_call.1} parent=1 // loop_header_branch
      %22 = sbr.rel (%p20) target = $region8
    $region5: #{tpu_custom_call.1} parent=1 // loop_body
      %s24 = ssub.s32 %s19, 1
      %s25 = ssub.s32 %s19, 2
      %s32 = sadd.s32 1, %s27
      %p33 = scmp.ge.s32.totalorder %s32, 1
      %s34 = scalar_select %p33, 0, %s32
      %s35 = sadd.s32 1, %s26
      %s36 = scalar_select %p33, %s35, %s26
      %p37 = scmp.ge.s32.totalorder %s36, 2
      %s38 = scalar_select %p37, 0, %s36
      %s40 = sadd.s32 %s39, 1
      %p43 = scmp.eq.s32.totalorder %s19, 1
      %p44 = scmp.ne.s32.totalorder %s39, %s41
      %p45 = scmp.eq.s32.totalorder %s19, 0
      %p46 = por %p44, %p45
      %p47 = scmp.ne.s32.totalorder %s39, %s41
      %p48 = scmp.eq.s32.totalorder %s24, 1
      %p49 = por %p47, %p48
      %p50 = scmp.ne.s32.totalorder %s41, %s42
      %p51 = scmp.eq.s32.totalorder %s24, 0
      %p52 = por %p50, %p51
      %p53 = scmp.ne.s32.totalorder %s41, %s42
      %p54 = scmp.eq.s32.totalorder %s25, 1
      %p55 = por %p53, %p54
      %p57 = scmp.ne.s32.totalorder %s42, %s56
      %p58 = scmp.eq.s32.totalorder %s25, 0
      %p59 = por %p57, %p58
      %s60 = ssub.s32 %s26, %s38
      %s61 = ssub.s32 %s27, %s34
      %s62 = sor.u32 %s60, %s61
      %p63 = scmp.eq.s32.totalorder %s62, 0
      %s65 = sadd.s32 %s64, 1
      %s66 = scalar_select %p63, %s64, %s65
      %p69 = pneg %p63
      %p70 = scmp.eq.s32.totalorder %s19, 1
      %p71 = por %p69, %p70
      %p72 = scmp.ne.s32.totalorder %s64, %s67
      %p73 = scmp.eq.s32.totalorder %s19, 0
      %p74 = por %p72, %p73
      %p75 = scmp.ne.s32.totalorder %s64, %s67
      %p76 = scmp.eq.s32.totalorder %s24, 1
      %p77 = por %p75, %p76
      %p78 = scmp.ne.s32.totalorder %s67, %s68
      %p79 = scmp.eq.s32.totalorder %s24, 0
      %p80 = por %p78, %p79
      %p81 = scmp.ne.s32.totalorder %s67, %s68
      %p82 = scmp.eq.s32.totalorder %s25, 1
      %p83 = por %p81, %p82
      %p85 = scmp.ne.s32.totalorder %s68, %s84
      %p86 = scmp.eq.s32.totalorder %s25, 0
      %p87 = por %p85, %p86
      %s88 = ssub.s32 %s26, %s38
      %s89 = ssub.s32 %s27, %s34
      %s90 = sor.u32 %s88, %s89
      %p91 = scmp.eq.s32.totalorder %s90, 0
      %s93 = sadd.s32 %s92, 1
      %s94 = scalar_select %p91, %s92, %s93
      %p97 = pneg %p91
      %p98 = scmp.eq.s32.totalorder %s19, 1
      %p99 = por %p97, %p98
      %p100 = scmp.ne.s32.totalorder %s92, %s95
      %p101 = scmp.eq.s32.totalorder %s19, 0
      %p102 = por %p100, %p101
      %p103 = scmp.ne.s32.totalorder %s92, %s95
      %p104 = scmp.eq.s32.totalorder %s24, 1
      %p105 = por %p103, %p104
      %p106 = scmp.ne.s32.totalorder %s95, %s96
      %p107 = scmp.eq.s32.totalorder %s24, 0
      %p108 = por %p106, %p107
      %p109 = scmp.ne.s32.totalorder %s95, %s96
      %p110 = scmp.eq.s32.totalorder %s25, 1
      %p111 = por %p109, %p110
      %p113 = scmp.ne.s32.totalorder %s96, %s112
      %p114 = scmp.eq.s32.totalorder %s25, 0
      %p115 = por %p113, %p114
      %s117 = sadd.s32 %s116, 1
      %p120 = scmp.eq.s32.totalorder %s19, 1
      %p121 = scmp.ne.s32.totalorder %s116, %s118
      %p122 = scmp.eq.s32.totalorder %s19, 0
      %p123 = por %p121, %p122
      %p124 = scmp.ne.s32.totalorder %s116, %s118
      %p125 = scmp.eq.s32.totalorder %s24, 1
      %p126 = por %p124, %p125
      %p127 = scmp.ne.s32.totalorder %s118, %s119
      %p128 = scmp.eq.s32.totalorder %s24, 0
      %p129 = por %p127, %p128
      %p130 = scmp.ne.s32.totalorder %s118, %s119
      %p131 = scmp.eq.s32.totalorder %s25, 1
      %p132 = por %p130, %p131
      %p134 = scmp.ne.s32.totalorder %s119, %s133
      %p135 = scmp.eq.s32.totalorder %s25, 0
      %p136 = por %p134, %p135
      %s138 = sadd.s32 %s137, 1
      %p141 = scmp.eq.s32.totalorder %s19, 1
      %p142 = scmp.ne.s32.totalorder %s137, %s139
      %p143 = scmp.eq.s32.totalorder %s19, 0
      %p144 = por %p142, %p143
      %p145 = scmp.ne.s32.totalorder %s137, %s139
      %p146 = scmp.eq.s32.totalorder %s24, 1
      %p147 = por %p145, %p146
      %p148 = scmp.ne.s32.totalorder %s139, %s140
      %p149 = scmp.eq.s32.totalorder %s24, 0
      %p150 = por %p148, %p149
      %p151 = scmp.ne.s32.totalorder %s139, %s140
      %p152 = scmp.eq.s32.totalorder %s25, 1
      %p153 = por %p151, %p152
      %p155 = scmp.ne.s32.totalorder %s140, %s154
      %p156 = scmp.eq.s32.totalorder %s25, 0
      %p157 = por %p155, %p156
      %s159 = sadd.s32 %s158, 1
      %p162 = scmp.eq.s32.totalorder %s19, 1
      %p163 = scmp.ne.s32.totalorder %s158, %s160
      %p164 = scmp.eq.s32.totalorder %s19, 0
      %p165 = por %p163, %p164
      %p166 = scmp.ne.s32.totalorder %s158, %s160
      %p167 = scmp.eq.s32.totalorder %s24, 1
      %p168 = por %p166, %p167
      %p169 = scmp.ne.s32.totalorder %s160, %s161
      %p170 = scmp.eq.s32.totalorder %s24, 0
      %p171 = por %p169, %p170
      %p172 = scmp.ne.s32.totalorder %s160, %s161
      %p173 = scmp.eq.s32.totalorder %s25, 1
      %p174 = por %p172, %p173
      %p176 = scmp.ne.s32.totalorder %s161, %s175
      %p177 = scmp.eq.s32.totalorder %s25, 0
      %p178 = por %p176, %p177
      %s180 = sadd.s32 %s179, 1
      %p183 = scmp.eq.s32.totalorder %s19, 1
      %p184 = scmp.ne.s32.totalorder %s179, %s181
      %p185 = scmp.eq.s32.totalorder %s19, 0
      %p186 = por %p184, %p185
      %p187 = scmp.ne.s32.totalorder %s179, %s181
      %p188 = scmp.eq.s32.totalorder %s24, 1
      %p189 = por %p187, %p188
      %p190 = scmp.ne.s32.totalorder %s181, %s182
      %p191 = scmp.eq.s32.totalorder %s24, 0
      %p192 = por %p190, %p191
      %p193 = scmp.ne.s32.totalorder %s181, %s182
      %p194 = scmp.eq.s32.totalorder %s25, 1
      %p195 = por %p193, %p194
      %p197 = scmp.ne.s32.totalorder %s182, %s196
      %p198 = scmp.eq.s32.totalorder %s25, 0
      %p199 = por %p197, %p198
      %s200 = ssub.s32 %s26, %s38
      %s201 = ssub.s32 %s27, %s34
      %s202 = sor.u32 %s200, %s201
      %p203 = scmp.eq.s32.totalorder %s202, 0
      %s205 = sadd.s32 %s204, 1
      %s206 = scalar_select %p203, %s204, %s205
      %p209 = pneg %p203
      %p210 = scmp.eq.s32.totalorder %s19, 1
      %p211 = por %p209, %p210
      %p212 = scmp.ne.s32.totalorder %s204, %s207
      %p213 = scmp.eq.s32.totalorder %s19, 0
      %p214 = por %p212, %p213
      %p215 = scmp.ne.s32.totalorder %s204, %s207
      %p216 = scmp.eq.s32.totalorder %s24, 1
      %p217 = por %p215, %p216
      %p218 = scmp.ne.s32.totalorder %s207, %s208
      %p219 = scmp.eq.s32.totalorder %s24, 0
      %p220 = por %p218, %p219
      %p221 = scmp.ne.s32.totalorder %s207, %s208
      %p222 = scmp.eq.s32.totalorder %s25, 1
      %p223 = por %p221, %p222
      %p225 = scmp.ne.s32.totalorder %s208, %s224
      %p226 = scmp.eq.s32.totalorder %s25, 0
      %p227 = por %p225, %p226
      %s228 = ssub.s32 %s26, %s38
      %s229 = ssub.s32 %s27, %s34
      %s230 = sor.u32 %s228, %s229
      %p231 = scmp.eq.s32.totalorder %s230, 0
      %s233 = sadd.s32 %s232, 1
      %s234 = scalar_select %p231, %s232, %s233
      %p237 = pneg %p231
      %p238 = scmp.eq.s32.totalorder %s19, 1
      %p239 = por %p237, %p238
      %p240 = scmp.ne.s32.totalorder %s232, %s235
      %p241 = scmp.eq.s32.totalorder %s19, 0
      %p242 = por %p240, %p241
      %p243 = scmp.ne.s32.totalorder %s232, %s235
      %p244 = scmp.eq.s32.totalorder %s24, 1
      %p245 = por %p243, %p244
      %p246 = scmp.ne.s32.totalorder %s235, %s236
      %p247 = scmp.eq.s32.totalorder %s24, 0
      %p248 = por %p246, %p247
      %p249 = scmp.ne.s32.totalorder %s235, %s236
      %p250 = scmp.eq.s32.totalorder %s25, 1
      %p251 = por %p249, %p250
      %p253 = scmp.ne.s32.totalorder %s236, %s252
      %p254 = scmp.eq.s32.totalorder %s25, 0
      %p255 = por %p253, %p254
      %p256 = scmp.le.s32.totalorder 1, %s19
      %p257 = scmp.lt.s32.totalorder %s19, 3
      %p258 = pnand %p256, %p257
      %p259 = pneg %p258
      // Predicated region
      $region9: #{tpu_custom_call.1} parent=5 // pred_check
        _
      $region10: #{tpu_custom_call.1} parent=5 // pred_check_branch
        %261 = sbr.rel (%p258) target = $region12
      $region11: #{tpu_custom_call.1} parent=5 // pred_region
        %s262 = ssub.s32 %s19, 1
        // Predicated region
        $region13: #{tpu_custom_call.1} parent=11 // pred_check
          %p263 = pneg %p52
        $region14: #{tpu_custom_call.1} parent=11 // pred_check_branch
          %265 = sbr.rel (%p263) target = $region16
        $region15: #{tpu_custom_call.1} parent=11 // pred_region
          %s267 = ssub.s32 64, 64
          %268 = vsyncadd [#allocation5], %s267
          %s270 = sshll.u32 %s0, 4
          %s271 = int_to_ptr.vmem [resolvable:$true] %s270
          %273 = dma.vmem_to_smem %s271, 64, [#allocation3], [#allocation5]
        $region16: #{tpu_custom_call.1} parent=11 // pred_fallthru
          _
        // Predicated region
        $region17: #{tpu_custom_call.1} parent=11 // pred_check
          %p274 = pneg %p129
        $region18: #{tpu_custom_call.1} parent=11 // pred_check_branch
          %276 = sbr.rel (%p274) target = $region20
        $region19: #{tpu_custom_call.1} parent=11 // pred_region
          _
        $region20: #{tpu_custom_call.1} parent=11 // pred_fallthru
          _
        // Predicated region
        $region21: #{tpu_custom_call.1} parent=11 // pred_check
          %p277 = pneg %p150
        $region22: #{tpu_custom_call.1} parent=11 // pred_check_branch
          %279 = sbr.rel (%p277) target = $region24
        $region23: #{tpu_custom_call.1} parent=11 // pred_region
          _
        $region24: #{tpu_custom_call.1} parent=11 // pred_fallthru
          _
        // Predicated region
        $region25: #{tpu_custom_call.1} parent=11 // pred_check
          %p280 = pneg %p171
        $region26: #{tpu_custom_call.1} parent=11 // pred_check_branch
          %282 = sbr.rel (%p280) target = $region28
        $region27: #{tpu_custom_call.1} parent=11 // pred_region
          _
        $region28: #{tpu_custom_call.1} parent=11 // pred_fallthru
          _
        // Predicated region
        $region29: #{tpu_custom_call.1} parent=11 // pred_check
          %p283 = pneg %p192
        $region30: #{tpu_custom_call.1} parent=11 // pred_check_branch
          %285 = sbr.rel (%p283) target = $region32
        $region31: #{tpu_custom_call.1} parent=11 // pred_region
          _
        $region32: #{tpu_custom_call.1} parent=11 // pred_fallthru
          _
      $region12: #{tpu_custom_call.1} parent=5 // pred_fallthru
        _
      %p286 = scmp.lt.s32.totalorder %s19, 2
      // Predicated region
      $region33: #{tpu_custom_call.1} parent=5 // pred_check
        %p287 = pneg %p286
      $region34: #{tpu_custom_call.1} parent=5 // pred_check_branch
        %289 = sbr.rel (%p287) target = $region36
      $region35: #{tpu_custom_call.1} parent=5 // pred_region
        // Predicated region
        $region37: #{tpu_custom_call.1} parent=35 // pred_check
          %p290 = pneg %p74
        $region38: #{tpu_custom_call.1} parent=35 // pred_check_branch
          %292 = sbr.rel (%p290) target = $region40
        $region39: #{tpu_custom_call.1} parent=35 // pred_region
          %p293 = scmp.lt.s32.totalorder %s26, 1
          %s294 = scalar_select %p293, %s26, 1
          %p295 = scmp.lt.s32.totalorder %s27, 0
          %s296 = scalar_select %p295, %s27, 0
          %s297 = smul.addr %s294, 4
          %s298 = sadd.s32 %s296, %s297
          %s299 = smul.addr %s298, 8
          %s300 = scalar_lea.vmem %s1, %s299
        $region40: #{tpu_custom_call.1} parent=35 // pred_fallthru
          _
        // Predicated region
        $region41: #{tpu_custom_call.1} parent=35 // pred_check
          %p301 = pneg %p102
        $region42: #{tpu_custom_call.1} parent=35 // pred_check_branch
          %303 = sbr.rel (%p301) target = $region44
        $region43: #{tpu_custom_call.1} parent=35 // pred_region
          %s304 = sand.u32 %s92, 1
          %s305 = scalar_lea.sflag [#allocation4], %s304
          %s306 = sand.u32 %s92, 1
          %s307 = smul.addr %s306, 32
          %s308 = scalar_lea.vmem [#allocation6], %s307
          %s310 = ssub.s32 512, 512
          %311 = vsyncadd %s305, %s310
          %s312 = smul.addr %s26, 4
          %s313 = sadd.s32 %s27, %s312
          %s314 = smul.addr %s313, 128
          %s315 = scalar_lea.hbm %s2, %s314
          %s316 = sshll.u32 %s308, 4
          %s317 = int_to_ptr.vmem [resolvable:$true] %s316
          %322 = dma.hbm_to_vmem [thread:$0]  %s315, 512, %s317, %s305, 128, 128, 8
        $region44: #{tpu_custom_call.1} parent=35 // pred_fallthru
          _
      $region36: #{tpu_custom_call.1} parent=5 // pred_fallthru
        _
      %p323 = scmp.le.s32.totalorder 1, %s19
      %p324 = scmp.lt.s32.totalorder %s19, 3
      %p325 = pnand %p323, %p324
      %p326 = pneg %p325
      // Predicated region
      $region45: #{tpu_custom_call.1} parent=5 // pred_check
        _
      $region46: #{tpu_custom_call.1} parent=5 // pred_check_branch
        %328 = sbr.rel (%p325) target = $region48
      $region47: #{tpu_custom_call.1} parent=5 // pred_region
        %s329 = ssub.s32 %s19, 1
        // Predicated region
        $region49: #{tpu_custom_call.1} parent=47 // pred_check
          %p330 = pneg %p52
        $region50: #{tpu_custom_call.1} parent=47 // pred_check_branch
          %332 = sbr.rel (%p330) target = $region52
        $region51: #{tpu_custom_call.1} parent=47 // pred_region
          %333 = dma.done [#allocation5], 64
        $region52: #{tpu_custom_call.1} parent=47 // pred_fallthru
          _
        %s334 = sand.u32 %s95, 1
        %s335 = scalar_lea.sflag [#allocation4], %s334
        %s336 = sand.u32 %s95, 1
        %s337 = smul.addr %s336, 32
        %s338 = scalar_lea.vmem [#allocation6], %s337
        // Predicated region
        $region53: #{tpu_custom_call.1} parent=47 // pred_check
          %p339 = pneg %p108
        $region54: #{tpu_custom_call.1} parent=47 // pred_check_branch
          %341 = sbr.rel (%p339) target = $region56
        $region55: #{tpu_custom_call.1} parent=47 // pred_region
          %342 = dma.done %s335, 512
        $region56: #{tpu_custom_call.1} parent=47 // pred_fallthru
          _
        %343 = sfence
        %p344 = pneg %p52
        %p345 = pneg %p49
        %p346 = scmp.lt.s32.totalorder %s28, 1
        %s347 = scalar_select %p346, %s28, 1
        %p348 = scmp.lt.s32.totalorder %s29, 0
        %s349 = scalar_select %p348, %s29, 0
        %s350 = smul.addr %s347, 4
        %s351 = sadd.s32 %s349, %s350
        %s352 = smul.addr %s351, 8
        %s353 = scalar_lea.vmem %s1, %s352
        %p354 = pneg %p80
        %p355 = pneg %p77
        %s356 = sand.u32 %s95, 1
        %s357 = scalar_lea.sflag [#allocation4], %s356
        %s358 = sand.u32 %s95, 1
        %s359 = smul.addr %s358, 32
        %s360 = scalar_lea.vmem [#allocation6], %s359
        %p361 = pneg %p108
        %p362 = pneg %p105
        %p363 = pneg %p129
        %p364 = pneg %p126
        %p365 = pneg %p150
        %p366 = pneg %p147
        %p367 = pneg %p171
        %p368 = pneg %p168
        %p369 = pneg %p192
        %p370 = pneg %p189
        %p371 = pneg %p220
        %p372 = pneg %p217
        %p373 = scmp.lt.s32.totalorder %s28, 1
        %s374 = scalar_select %p373, %s28, 1
        %p375 = scmp.lt.s32.totalorder %s29, 0
        %s376 = scalar_select %p375, %s29, 0
        %s377 = sadd.s32 %s376, %s374
        %s378 = scalar_lea.vmem %s7, %s377
        %p379 = pneg %p248
        %p380 = pneg %p245
        %p381 = scmp.lt.s32.totalorder %s28, 1
        %s382 = scalar_select %p381, %s28, 1
        %p383 = scmp.lt.s32.totalorder %s29, 0
        %s384 = scalar_select %p383, %s29, 0
        %s385 = sadd.s32 %s384, %s382
        %s386 = scalar_lea.vmem %s8, %s385
        %p387 = scmp.lt.s32.totalorder %s28, 1
        %s388 = scalar_select %p387, %s28, 1
        %p389 = scmp.lt.s32.totalorder %s29, 0
        %s390 = scalar_select %p389, %s29, 0
        %s391 = smul.addr %s388, 4
        %s392 = sadd.s32 %s390, %s391
        %s393 = smul.addr %s392, 8
        %s394 = scalar_lea.vmem %s1, %s393
        %p395 = scmp.lt.s32.totalorder %s28, 1
        %s396 = scalar_select %p395, %s28, 1
        %p397 = scmp.lt.s32.totalorder %s29, 0
        %s398 = scalar_select %p397, %s29, 0
        %s399 = sadd.s32 %s398, %s396
        %s400 = scalar_lea.vmem %s7, %s399
        %p401 = scmp.lt.s32.totalorder %s28, 1
        %s402 = scalar_select %p401, %s28, 1
        %p403 = scmp.lt.s32.totalorder %s29, 0
        %s404 = scalar_select %p403, %s29, 0
        %s405 = sadd.s32 %s404, %s402
        %s406 = scalar_lea.vmem %s8, %s405
        %s407 = sld [smem:[#allocation3 + %s28]]
        %s408 = sshra.s32 %s28, 7
        %s409 = sand.u32 %s28, 127
        %s410 = sadd.s32 %s408, 1
        %s411 = smul.u32 %s410, 128
        %s412 = sshra.s32 %s28, 7
        %s413 = sand.u32 %s28, 127
        %s414 = sadd.s32 %s411, %s413
        %s415 = sld [smem:[#allocation3 + %s414]]
        %s416 = sadd.s32 %s408, 2
        %s417 = smul.u32 %s416, 128
        %s418 = sadd.s32 %s417, %s413
        %s419 = sld [smem:[#allocation3 + %s418]]
        %v420 = vld [vmem:[%s3] sm:$0xff]
        %v421 = vld [vmem:[%s3 + $0x8] sm:$0xff]
        %v422 = vld [vmem:[%s3 + $0x10] sm:$0xff]
        %v423 = vld [vmem:[%s3 + $0x18] sm:$0xff]
        %v424 = vld [vmem:[%s4] sm:$0x1]
        %v425 = vld [vmem:[%s5] sm:$0xff]
        %v426 = vld [vmem:[%s5 + $0x8] sm:$0xff]
        %v427 = vld [vmem:[%s5 + $0x10] sm:$0xff]
        %v428 = vld [vmem:[%s5 + $0x18] sm:$0xff]
        %v429 = vld [vmem:[%s394] sm:$0x1]
        %s430 = scalar_lea.vmem %s394, 8
        %v431 = vld [vmem:[%s430] sm:$0x1]
        %s432 = scalar_lea.vmem %s394, 24
        %v433 = vld [vmem:[%s432] sm:$0x1]
        %v434 = vstv %s407
        %v435 = vmul.f32 %v434, %v429
        %v436 = vstv %s415
        %v437 = vmul.f32 %v436, %v433
        %v438 = vadd.f32 %v435, %v437
        %v439 = vld [vmem:[%s338] sm:$0xff]
        %v440 = vld [vmem:[%s338 + $0x8] sm:$0xff]
        %v441 = vld [vmem:[%s338 + $0x10] sm:$0xff]
        %v442 = vld [vmem:[%s338 + $0x18] sm:$0xff]
        %444 = vset.pattern.permute.xlu0 0
        %445 = vperm.xlu0 %444, %v425
        %v446 = vpop.permute.xlu0 %445
        %449 = vset.pattern.permute.xlu0 0
        %450 = vperm.xlu0 %449, %v426
        %v451 = vpop.permute.xlu0 %450
        %454 = vset.pattern.permute.xlu0 0
        %455 = vperm.xlu0 %454, %v427
        %v456 = vpop.permute.xlu0 %455
        %459 = vset.pattern.permute.xlu0 0
        %460 = vperm.xlu0 %459, %v428
        %v461 = vpop.permute.xlu0 %460
        %v463 = vadd.f32 %v439, %v446
        %v464 = vadd.f32 %v440, %v451
        %v465 = vadd.f32 %v441, %v456
        %v466 = vadd.f32 %v442, %v461
        %v467 = vmul.f32 %v431, %v429
        %469 = vset.pattern.permute.xlu0 0
        %470 = vperm.xlu0 %469, %v420
        %v471 = vpop.permute.xlu0 %470
        %474 = vset.pattern.permute.xlu0 0
        %475 = vperm.xlu0 %474, %v421
        %v476 = vpop.permute.xlu0 %475
        %479 = vset.pattern.permute.xlu0 0
        %480 = vperm.xlu0 %479, %v422
        %v481 = vpop.permute.xlu0 %480
        %484 = vset.pattern.permute.xlu0 0
        %485 = vperm.xlu0 %484, %v423
        %v486 = vpop.permute.xlu0 %485
        %v488 = vlaneseq
        %v489 = vshrl.u32 %v488, 7
        %v490 = vsub.s32 0, %v489
        %v491 = vrot.slane %v467, %v490
        %v492 = vmul.f32 %v471, %v491
        %v493 = vmul.f32 %v476, %v491
        %v494 = vmul.f32 %v481, %v491
        %v495 = vmul.f32 %v486, %v491
        %v496 = vadd.f32 %v463, %v492
        %v497 = vadd.f32 %v464, %v493
        %v498 = vadd.f32 %v465, %v494
        %v499 = vadd.f32 %v466, %v495
        %v500 = vsub.f32 1.0, %v431
        %v501 = vmul.f32 %v500, %v438
        %502 = vset.pattern.permute.xlu0 1
        %503 = vperm.xlu0 %502, %v420
        %v504 = vpop.permute.xlu0 %503
        %506 = vset.pattern.permute.xlu0 1
        %507 = vperm.xlu0 %506, %v421
        %v508 = vpop.permute.xlu0 %507
        %510 = vset.pattern.permute.xlu0 1
        %511 = vperm.xlu0 %510, %v422
        %v512 = vpop.permute.xlu0 %511
        %514 = vset.pattern.permute.xlu0 1
        %515 = vperm.xlu0 %514, %v423
        %v516 = vpop.permute.xlu0 %515
        %v518 = vlaneseq
        %v519 = vshrl.u32 %v518, 7
        %v520 = vsub.s32 0, %v519
        %v521 = vrot.slane %v501, %v520
        %v522 = vmul.f32 %v504, %v521
        %v523 = vmul.f32 %v508, %v521
        %v524 = vmul.f32 %v512, %v521
        %v525 = vmul.f32 %v516, %v521
        %v526 = vadd.f32 %v496, %v522
        %v527 = vadd.f32 %v497, %v523
        %v528 = vadd.f32 %v498, %v524
        %v529 = vadd.f32 %v499, %v525
        %530 = vset.pattern.permute.xlu0 2
        %531 = vperm.xlu0 %530, %v420
        %v532 = vpop.permute.xlu0 %531
        %534 = vset.pattern.permute.xlu0 2
        %535 = vperm.xlu0 %534, %v421
        %v536 = vpop.permute.xlu0 %535
        %538 = vset.pattern.permute.xlu0 2
        %539 = vperm.xlu0 %538, %v422
        %v540 = vpop.permute.xlu0 %539
        %542 = vset.pattern.permute.xlu0 2
        %543 = vperm.xlu0 %542, %v423
        %v544 = vpop.permute.xlu0 %543
        %v546 = vlaneseq
        %v547 = vshrl.u32 %v546, 7
        %v548 = vsub.s32 0, %v547
        %v549 = vrot.slane %v431, %v548
        %v550 = vmul.f32 %v532, %v549
        %v551 = vmul.f32 %v536, %v549
        %v552 = vmul.f32 %v540, %v549
        %v553 = vmul.f32 %v544, %v549
        %v554 = vadd.f32 %v526, %v550
        %v555 = vadd.f32 %v527, %v551
        %v556 = vadd.f32 %v528, %v552
        %v557 = vadd.f32 %v529, %v553
        %v558 = vmax.f32 %v554, 0.0
        %v559 = vmax.f32 %v555, 0.0
        %v560 = vmax.f32 %v556, 0.0
        %v561 = vmax.f32 %v557, 0.0
        %v562 = vstv %s419
        %vm563 = vcmask 261120
        %v565 = vsel %vm563, %v424, 0
        %567 = vmatprep.subr.mxu0 0.0
        %568 = vmatpush1.msra.mxu0 %v558
        %569 = vmatprep.subr.mxu0 0.0
        %570 = vmatpush1.msra.mxu0 %v559
        %571 = vmatprep.subr.mxu0 0.0
        %572 = vmatpush1.msra.mxu0 %v560
        %573 = vmatprep.subr.mxu0 0.0
        %574 = vmatpush1.msra.mxu0 %v561
        %575 = vmatprep.subr.mxu0 0.0
        %576 = vmatpush1.msra.mxu0 0.0
        %577 = vmatprep.subr.mxu0 0.0
        %578 = vmatpush1.msra.mxu0 0.0
        %579 = vmatprep.subr.mxu0 0.0
        %580 = vmatpush1.msra.mxu0 0.0
        %581 = vmatprep.subr.mxu0 0.0
        %582 = vmatpush1.msra.mxu0 0.0
        %583 = vmatprep.subr.mxu0 0.0
        %584 = vmatpush1.msra.mxu0 0.0
        %585 = vmatprep.subr.mxu0 0.0
        %586 = vmatpush1.msra.mxu0 0.0
        %587 = vmatprep.subr.mxu0 0.0
        %588 = vmatpush1.msra.mxu0 0.0
        %589 = vmatprep.subr.mxu0 0.0
        %590 = vmatpush1.msra.mxu0 0.0
        %591 = vmatprep.subr.mxu0 0.0
        %592 = vmatpush1.msra.mxu0 0.0
        %593 = vmatprep.subr.mxu0 0.0
        %594 = vmatpush1.msra.mxu0 0.0
        %595 = vmatprep.subr.mxu0 0.0
        %596 = vmatpush1.msra.mxu0 0.0
        %597 = vmatprep.subr.mxu0 0.0
        %598 = vmatpush1.msra.mxu0 0.0
        %599 = vmatprep.subr.mxu0 0.0
        %600 = vmatpush1.msra.mxu0 0.0
        %601 = vmatprep.subr.mxu0 0.0
        %602 = vmatpush1.msra.mxu0 0.0
        %603 = vmatprep.subr.mxu0 0.0
        %604 = vmatpush1.msra.mxu0 0.0
        %605 = vmatprep.subr.mxu0 0.0
        %606 = vmatpush1.msra.mxu0 0.0
        %607 = vmatprep.subr.mxu0 0.0
        %608 = vmatpush1.msra.mxu0 0.0
        %609 = vmatprep.subr.mxu0 0.0
        %610 = vmatpush1.msra.mxu0 0.0
        %611 = vmatprep.subr.mxu0 0.0
        %612 = vmatpush1.msra.mxu0 0.0
        %613 = vmatprep.subr.mxu0 0.0
        %614 = vmatpush1.msra.mxu0 0.0
        %615 = vmatprep.subr.mxu0 0.0
        %616 = vmatpush1.msra.mxu0 0.0
        %617 = vmatprep.subr.mxu0 0.0
        %618 = vmatpush1.msra.mxu0 0.0
        %619 = vmatprep.subr.mxu0 0.0
        %620 = vmatpush1.msra.mxu0 0.0
        %621 = vmatprep.subr.mxu0 0.0
        %622 = vmatpush1.msra.mxu0 0.0
        %623 = vmatprep.subr.mxu0 0.0
        %624 = vmatpush1.msra.mxu0 0.0
        %625 = vmatprep.subr.mxu0 0.0
        %626 = vmatpush1.msra.mxu0 0.0
        %627 = vmatprep.subr.mxu0 0.0
        %628 = vmatpush1.msra.mxu0 0.0
        %629 = vmatprep.subr.mxu0 0.0
        %630 = vmatpush1.msra.mxu0 0.0
        %631 = vmatprep.mubr.f32.mxu0 0.0
        %632 = vmatmul.mubr.f32.gmra.mrb[0].mxu0 %v565
        %v633 = vpop.f32.mrb[0].mxu0
        %v634 = vadd.f32 %v562, %v633
        %v635 = vpop.f32.mrb[0].mxu0
        %636 = vdwg.mxu0
        %637 = vst [vmem:[#allocation2] sm:$0x1] %v634
        %v638 = vld [vmem:[%s394 + $0x1] sm:$0x1]
        %v639 = vld [vmem:[%s430 + $0x1] sm:$0x1]
        %v640 = vld [vmem:[%s432 + $0x1] sm:$0x1]
        %v641 = vmul.f32 %v434, %v638
        %v642 = vmul.f32 %v436, %v640
        %v643 = vadd.f32 %v641, %v642
        %v644 = vld [vmem:[%s338] sm:$0xff]
        %v645 = vld [vmem:[%s338 + $0x8] sm:$0xff]
        %v646 = vld [vmem:[%s338 + $0x10] sm:$0xff]
        %v647 = vld [vmem:[%s338 + $0x18] sm:$0xff]
        %648 = vset.pattern.permute.xlu0 1
        %649 = vperm.xlu0 %648, %v425
        %v650 = vpop.permute.xlu0 %649
        %652 = vset.pattern.permute.xlu0 1
        %653 = vperm.xlu0 %652, %v426
        %v654 = vpop.permute.xlu0 %653
        %656 = vset.pattern.permute.xlu0 1
        %657 = vperm.xlu0 %656, %v427
        %v658 = vpop.permute.xlu0 %657
        %660 = vset.pattern.permute.xlu0 1
        %661 = vperm.xlu0 %660, %v428
        %v662 = vpop.permute.xlu0 %661
        %v664 = vadd.f32 %v644, %v650
        %v665 = vadd.f32 %v645, %v654
        %v666 = vadd.f32 %v646, %v658
        %v667 = vadd.f32 %v647, %v662
        %v668 = vmul.f32 %v639, %v638
        %v669 = vlaneseq
        %v670 = vshrl.u32 %v669, 7
        %v671 = vsub.s32 0, %v670
        %v672 = vrot.slane %v668, %v671
        %v673 = vmul.f32 %v471, %v672
        %v674 = vmul.f32 %v476, %v672
        %v675 = vmul.f32 %v481, %v672
        %v676 = vmul.f32 %v486, %v672
        %v677 = vadd.f32 %v664, %v673
        %v678 = vadd.f32 %v665, %v674
        %v679 = vadd.f32 %v666, %v675
        %v680 = vadd.f32 %v667, %v676
        %v681 = vsub.f32 1.0, %v639
        %v682 = vmul.f32 %v681, %v643
        %v683 = vlaneseq
        %v684 = vshrl.u32 %v683, 7
        %v685 = vsub.s32 0, %v684
        %v686 = vrot.slane %v682, %v685
        %v687 = vmul.f32 %v504, %v686
        %v688 = vmul.f32 %v508, %v686
        %v689 = vmul.f32 %v512, %v686
        %v690 = vmul.f32 %v516, %v686
        %v691 = vadd.f32 %v677, %v687
        %v692 = vadd.f32 %v678, %v688
        %v693 = vadd.f32 %v679, %v689
        %v694 = vadd.f32 %v680, %v690
        %v695 = vlaneseq
        %v696 = vshrl.u32 %v695, 7
        %v697 = vsub.s32 0, %v696
        %v698 = vrot.slane %v639, %v697
        %v699 = vmul.f32 %v532, %v698
        %v700 = vmul.f32 %v536, %v698
        %v701 = vmul.f32 %v540, %v698
        %v702 = vmul.f32 %v544, %v698
        %v703 = vadd.f32 %v691, %v699
        %v704 = vadd.f32 %v692, %v700
        %v705 = vadd.f32 %v693, %v701
        %v706 = vadd.f32 %v694, %v702
        %v707 = vmax.f32 %v703, 0.0
        %v708 = vmax.f32 %v704, 0.0
        %v709 = vmax.f32 %v705, 0.0
        %v710 = vmax.f32 %v706, 0.0
        %711 = vmatprep.subr.mxu0 0.0
        %712 = vmatpush1.msra.mxu0 %v707
        %713 = vmatprep.subr.mxu0 0.0
        %714 = vmatpush1.msra.mxu0 %v708
        %715 = vmatprep.subr.mxu0 0.0
        %716 = vmatpush1.msra.mxu0 %v709
        %717 = vmatprep.subr.mxu0 0.0
        %718 = vmatpush1.msra.mxu0 %v710
        %719 = vmatprep.subr.mxu0 0.0
        %720 = vmatpush1.msra.mxu0 0.0
        %721 = vmatprep.subr.mxu0 0.0
        %722 = vmatpush1.msra.mxu0 0.0
        %723 = vmatprep.subr.mxu0 0.0
        %724 = vmatpush1.msra.mxu0 0.0
        %725 = vmatprep.subr.mxu0 0.0
        %726 = vmatpush1.msra.mxu0 0.0
        %727 = vmatprep.subr.mxu0 0.0
        %728 = vmatpush1.msra.mxu0 0.0
        %729 = vmatprep.subr.mxu0 0.0
        %730 = vmatpush1.msra.mxu0 0.0
        %731 = vmatprep.subr.mxu0 0.0
        %732 = vmatpush1.msra.mxu0 0.0
        %733 = vmatprep.subr.mxu0 0.0
        %734 = vmatpush1.msra.mxu0 0.0
        %735 = vmatprep.subr.mxu0 0.0
        %736 = vmatpush1.msra.mxu0 0.0
        %737 = vmatprep.subr.mxu0 0.0
        %738 = vmatpush1.msra.mxu0 0.0
        %739 = vmatprep.subr.mxu0 0.0
        %740 = vmatpush1.msra.mxu0 0.0
        %741 = vmatprep.subr.mxu0 0.0
        %742 = vmatpush1.msra.mxu0 0.0
        %743 = vmatprep.subr.mxu0 0.0
        %744 = vmatpush1.msra.mxu0 0.0
        %745 = vmatprep.subr.mxu0 0.0
        %746 = vmatpush1.msra.mxu0 0.0
        %747 = vmatprep.subr.mxu0 0.0
        %748 = vmatpush1.msra.mxu0 0.0
        %749 = vmatprep.subr.mxu0 0.0
        %750 = vmatpush1.msra.mxu0 0.0
        %751 = vmatprep.subr.mxu0 0.0
        %752 = vmatpush1.msra.mxu0 0.0
        %753 = vmatprep.subr.mxu0 0.0
        %754 = vmatpush1.msra.mxu0 0.0
        %755 = vmatprep.subr.mxu0 0.0
        %756 = vmatpush1.msra.mxu0 0.0
        %757 = vmatprep.subr.mxu0 0.0
        %758 = vmatpush1.msra.mxu0 0.0
        %759 = vmatprep.subr.mxu0 0.0
        %760 = vmatpush1.msra.mxu0 0.0
        %761 = vmatprep.subr.mxu0 0.0
        %762 = vmatpush1.msra.mxu0 0.0
        %763 = vmatprep.subr.mxu0 0.0
        %764 = vmatpush1.msra.mxu0 0.0
        %765 = vmatprep.subr.mxu0 0.0
        %766 = vmatpush1.msra.mxu0 0.0
        %767 = vmatprep.subr.mxu0 0.0
        %768 = vmatpush1.msra.mxu0 0.0
        %769 = vmatprep.subr.mxu0 0.0
        %770 = vmatpush1.msra.mxu0 0.0
        %771 = vmatprep.subr.mxu0 0.0
        %772 = vmatpush1.msra.mxu0 0.0
        %773 = vmatprep.subr.mxu0 0.0
        %774 = vmatpush1.msra.mxu0 0.0
        %775 = vmatprep.mubr.f32.mxu0 0.0
        %776 = vmatmul.mubr.f32.gmra.mrb[0].mxu0 %v565
        %v777 = vpop.f32.mrb[0].mxu0
        %v778 = vadd.f32 %v562, %v777
        %v779 = vpop.f32.mrb[0].mxu0
        %780 = vdwg.mxu0
        %781 = vst [vmem:[#allocation2 + $0x1] sm:$0x1] %v778
        %v782 = vld [vmem:[%s394 + $0x2] sm:$0x1]
        %v783 = vld [vmem:[%s430 + $0x2] sm:$0x1]
        %v784 = vld [vmem:[%s432 + $0x2] sm:$0x1]
        %v785 = vmul.f32 %v434, %v782
        %v786 = vmul.f32 %v436, %v784
        %v787 = vadd.f32 %v785, %v786
        %v788 = vld [vmem:[%s338] sm:$0xff]
        %v789 = vld [vmem:[%s338 + $0x8] sm:$0xff]
        %v790 = vld [vmem:[%s338 + $0x10] sm:$0xff]
        %v791 = vld [vmem:[%s338 + $0x18] sm:$0xff]
        %792 = vset.pattern.permute.xlu0 2
        %793 = vperm.xlu0 %792, %v425
        %v794 = vpop.permute.xlu0 %793
        %796 = vset.pattern.permute.xlu0 2
        %797 = vperm.xlu0 %796, %v426
        %v798 = vpop.permute.xlu0 %797
        %800 = vset.pattern.permute.xlu0 2
        %801 = vperm.xlu0 %800, %v427
        %v802 = vpop.permute.xlu0 %801
        %804 = vset.pattern.permute.xlu0 2
        %805 = vperm.xlu0 %804, %v428
        %v806 = vpop.permute.xlu0 %805
        %v808 = vadd.f32 %v788, %v794
        %v809 = vadd.f32 %v789, %v798
        %v810 = vadd.f32 %v790, %v802
        %v811 = vadd.f32 %v791, %v806
        %v812 = vmul.f32 %v783, %v782
        %v813 = vlaneseq
        %v814 = vshrl.u32 %v813, 7
        %v815 = vsub.s32 0, %v814
        %v816 = vrot.slane %v812, %v815
        %v817 = vmul.f32 %v471, %v816
        %v818 = vmul.f32 %v476, %v816
        %v819 = vmul.f32 %v481, %v816
        %v820 = vmul.f32 %v486, %v816
        %v821 = vadd.f32 %v808, %v817
        %v822 = vadd.f32 %v809, %v818
        %v823 = vadd.f32 %v810, %v819
        %v824 = vadd.f32 %v811, %v820
        %v825 = vsub.f32 1.0, %v783
        %v826 = vmul.f32 %v825, %v787
        %v827 = vlaneseq
        %v828 = vshrl.u32 %v827, 7
        %v829 = vsub.s32 0, %v828
        %v830 = vrot.slane %v826, %v829
        %v831 = vmul.f32 %v504, %v830
        %v832 = vmul.f32 %v508, %v830
        %v833 = vmul.f32 %v512, %v830
        %v834 = vmul.f32 %v516, %v830
        %v835 = vadd.f32 %v821, %v831
        %v836 = vadd.f32 %v822, %v832
        %v837 = vadd.f32 %v823, %v833
        %v838 = vadd.f32 %v824, %v834
        %v839 = vlaneseq
        %v840 = vshrl.u32 %v839, 7
        %v841 = vsub.s32 0, %v840
        %v842 = vrot.slane %v783, %v841
        %v843 = vmul.f32 %v532, %v842
        %v844 = vmul.f32 %v536, %v842
        %v845 = vmul.f32 %v540, %v842
        %v846 = vmul.f32 %v544, %v842
        %v847 = vadd.f32 %v835, %v843
        %v848 = vadd.f32 %v836, %v844
        %v849 = vadd.f32 %v837, %v845
        %v850 = vadd.f32 %v838, %v846
        %v851 = vmax.f32 %v847, 0.0
        %v852 = vmax.f32 %v848, 0.0
        %v853 = vmax.f32 %v849, 0.0
        %v854 = vmax.f32 %v850, 0.0
        %855 = vmatprep.subr.mxu0 0.0
        %856 = vmatpush1.msra.mxu0 %v851
        %857 = vmatprep.subr.mxu0 0.0
        %858 = vmatpush1.msra.mxu0 %v852
        %859 = vmatprep.subr.mxu0 0.0
        %860 = vmatpush1.msra.mxu0 %v853
        %861 = vmatprep.subr.mxu0 0.0
        %862 = vmatpush1.msra.mxu0 %v854
        %863 = vmatprep.subr.mxu0 0.0
        %864 = vmatpush1.msra.mxu0 0.0
        %865 = vmatprep.subr.mxu0 0.0
        %866 = vmatpush1.msra.mxu0 0.0
        %867 = vmatprep.subr.mxu0 0.0
        %868 = vmatpush1.msra.mxu0 0.0
        %869 = vmatprep.subr.mxu0 0.0
        %870 = vmatpush1.msra.mxu0 0.0
        %871 = vmatprep.subr.mxu0 0.0
        %872 = vmatpush1.msra.mxu0 0.0
        %873 = vmatprep.subr.mxu0 0.0
        %874 = vmatpush1.msra.mxu0 0.0
        %875 = vmatprep.subr.mxu0 0.0
        %876 = vmatpush1.msra.mxu0 0.0
        %877 = vmatprep.subr.mxu0 0.0
        %878 = vmatpush1.msra.mxu0 0.0
        %879 = vmatprep.subr.mxu0 0.0
        %880 = vmatpush1.msra.mxu0 0.0
        %881 = vmatprep.subr.mxu0 0.0
        %882 = vmatpush1.msra.mxu0 0.0
        %883 = vmatprep.subr.mxu0 0.0
        %884 = vmatpush1.msra.mxu0 0.0
        %885 = vmatprep.subr.mxu0 0.0
        %886 = vmatpush1.msra.mxu0 0.0
        %887 = vmatprep.subr.mxu0 0.0
        %888 = vmatpush1.msra.mxu0 0.0
        %889 = vmatprep.subr.mxu0 0.0
        %890 = vmatpush1.msra.mxu0 0.0
        %891 = vmatprep.subr.mxu0 0.0
        %892 = vmatpush1.msra.mxu0 0.0
        %893 = vmatprep.subr.mxu0 0.0
        %894 = vmatpush1.msra.mxu0 0.0
        %895 = vmatprep.subr.mxu0 0.0
        %896 = vmatpush1.msra.mxu0 0.0
        %897 = vmatprep.subr.mxu0 0.0
        %898 = vmatpush1.msra.mxu0 0.0
        %899 = vmatprep.subr.mxu0 0.0
        %900 = vmatpush1.msra.mxu0 0.0
        %901 = vmatprep.subr.mxu0 0.0
        %902 = vmatpush1.msra.mxu0 0.0
        %903 = vmatprep.subr.mxu0 0.0
        %904 = vmatpush1.msra.mxu0 0.0
        %905 = vmatprep.subr.mxu0 0.0
        %906 = vmatpush1.msra.mxu0 0.0
        %907 = vmatprep.subr.mxu0 0.0
        %908 = vmatpush1.msra.mxu0 0.0
        %909 = vmatprep.subr.mxu0 0.0
        %910 = vmatpush1.msra.mxu0 0.0
        %911 = vmatprep.subr.mxu0 0.0
        %912 = vmatpush1.msra.mxu0 0.0
        %913 = vmatprep.subr.mxu0 0.0
        %914 = vmatpush1.msra.mxu0 0.0
        %915 = vmatprep.subr.mxu0 0.0
        %916 = vmatpush1.msra.mxu0 0.0
        %917 = vmatprep.subr.mxu0 0.0
        %918 = vmatpush1.msra.mxu0 0.0
        %919 = vmatprep.mubr.f32.mxu0 0.0
        %920 = vmatmul.mubr.f32.gmra.mrb[0].mxu0 %v565
        %v921 = vpop.f32.mrb[0].mxu0
        %v922 = vadd.f32 %v562, %v921
        %v923 = vpop.f32.mrb[0].mxu0
        %924 = vdwg.mxu0
        %925 = vst [vmem:[#allocation2 + $0x2] sm:$0x1] %v922
        %v926 = vld [vmem:[%s394 + $0x3] sm:$0x1]
        %v927 = vld [vmem:[%s430 + $0x3] sm:$0x1]
        %v928 = vld [vmem:[%s432 + $0x3] sm:$0x1]
        %v929 = vmul.f32 %v434, %v926
        %v930 = vmul.f32 %v436, %v928
        %v931 = vadd.f32 %v929, %v930
        %v932 = vld [vmem:[%s338] sm:$0xff]
        %v933 = vld [vmem:[%s338 + $0x8] sm:$0xff]
        %v934 = vld [vmem:[%s338 + $0x10] sm:$0xff]
        %v935 = vld [vmem:[%s338 + $0x18] sm:$0xff]
        %936 = vset.pattern.permute.xlu0 3
        %937 = vperm.xlu0 %936, %v425
        %v938 = vpop.permute.xlu0 %937
        %940 = vset.pattern.permute.xlu0 3
        %941 = vperm.xlu0 %940, %v426
        %v942 = vpop.permute.xlu0 %941
        %944 = vset.pattern.permute.xlu0 3
        %945 = vperm.xlu0 %944, %v427
        %v946 = vpop.permute.xlu0 %945
        %948 = vset.pattern.permute.xlu0 3
        %949 = vperm.xlu0 %948, %v428
        %v950 = vpop.permute.xlu0 %949
        %v952 = vadd.f32 %v932, %v938
        %v953 = vadd.f32 %v933, %v942
        %v954 = vadd.f32 %v934, %v946
        %v955 = vadd.f32 %v935, %v950
        %v956 = vmul.f32 %v927, %v926
        %v957 = vlaneseq
        %v958 = vshrl.u32 %v957, 7
        %v959 = vsub.s32 0, %v958
        %v960 = vrot.slane %v956, %v959
        %v961 = vmul.f32 %v471, %v960
        %v962 = vmul.f32 %v476, %v960
        %v963 = vmul.f32 %v481, %v960
        %v964 = vmul.f32 %v486, %v960
        %v965 = vadd.f32 %v952, %v961
        %v966 = vadd.f32 %v953, %v962
        %v967 = vadd.f32 %v954, %v963
        %v968 = vadd.f32 %v955, %v964
        %v969 = vsub.f32 1.0, %v927
        %v970 = vmul.f32 %v969, %v931
        %v971 = vlaneseq
        %v972 = vshrl.u32 %v971, 7
        %v973 = vsub.s32 0, %v972
        %v974 = vrot.slane %v970, %v973
        %v975 = vmul.f32 %v504, %v974
        %v976 = vmul.f32 %v508, %v974
        %v977 = vmul.f32 %v512, %v974
        %v978 = vmul.f32 %v516, %v974
        %v979 = vadd.f32 %v965, %v975
        %v980 = vadd.f32 %v966, %v976
        %v981 = vadd.f32 %v967, %v977
        %v982 = vadd.f32 %v968, %v978
        %v983 = vlaneseq
        %v984 = vshrl.u32 %v983, 7
        %v985 = vsub.s32 0, %v984
        %v986 = vrot.slane %v927, %v985
        %v987 = vmul.f32 %v532, %v986
        %v988 = vmul.f32 %v536, %v986
        %v989 = vmul.f32 %v540, %v986
        %v990 = vmul.f32 %v544, %v986
        %v991 = vadd.f32 %v979, %v987
        %v992 = vadd.f32 %v980, %v988
        %v993 = vadd.f32 %v981, %v989
        %v994 = vadd.f32 %v982, %v990
        %v995 = vmax.f32 %v991, 0.0
        %v996 = vmax.f32 %v992, 0.0
        %v997 = vmax.f32 %v993, 0.0
        %v998 = vmax.f32 %v994, 0.0
        %999 = vmatprep.subr.mxu0 0.0
        %1000 = vmatpush1.msra.mxu0 %v995
        %1001 = vmatprep.subr.mxu0 0.0
        %1002 = vmatpush1.msra.mxu0 %v996
        %1003 = vmatprep.subr.mxu0 0.0
        %1004 = vmatpush1.msra.mxu0 %v997
        %1005 = vmatprep.subr.mxu0 0.0
        %1006 = vmatpush1.msra.mxu0 %v998
        %1007 = vmatprep.subr.mxu0 0.0
        %1008 = vmatpush1.msra.mxu0 0.0
        %1009 = vmatprep.subr.mxu0 0.0
        %1010 = vmatpush1.msra.mxu0 0.0
        %1011 = vmatprep.subr.mxu0 0.0
        %1012 = vmatpush1.msra.mxu0 0.0
        %1013 = vmatprep.subr.mxu0 0.0
        %1014 = vmatpush1.msra.mxu0 0.0
        %1015 = vmatprep.subr.mxu0 0.0
        %1016 = vmatpush1.msra.mxu0 0.0
        %1017 = vmatprep.subr.mxu0 0.0
        %1018 = vmatpush1.msra.mxu0 0.0
        %1019 = vmatprep.subr.mxu0 0.0
        %1020 = vmatpush1.msra.mxu0 0.0
        %1021 = vmatprep.subr.mxu0 0.0
        %1022 = vmatpush1.msra.mxu0 0.0
        %1023 = vmatprep.subr.mxu0 0.0
        %1024 = vmatpush1.msra.mxu0 0.0
        %1025 = vmatprep.subr.mxu0 0.0
        %1026 = vmatpush1.msra.mxu0 0.0
        %1027 = vmatprep.subr.mxu0 0.0
        %1028 = vmatpush1.msra.mxu0 0.0
        %1029 = vmatprep.subr.mxu0 0.0
        %1030 = vmatpush1.msra.mxu0 0.0
        %1031 = vmatprep.subr.mxu0 0.0
        %1032 = vmatpush1.msra.mxu0 0.0
        %1033 = vmatprep.subr.mxu0 0.0
        %1034 = vmatpush1.msra.mxu0 0.0
        %1035 = vmatprep.subr.mxu0 0.0
        %1036 = vmatpush1.msra.mxu0 0.0
        %1037 = vmatprep.subr.mxu0 0.0
        %1038 = vmatpush1.msra.mxu0 0.0
        %1039 = vmatprep.subr.mxu0 0.0
        %1040 = vmatpush1.msra.mxu0 0.0
        %1041 = vmatprep.subr.mxu0 0.0
        %1042 = vmatpush1.msra.mxu0 0.0
        %1043 = vmatprep.subr.mxu0 0.0
        %1044 = vmatpush1.msra.mxu0 0.0
        %1045 = vmatprep.subr.mxu0 0.0
        %1046 = vmatpush1.msra.mxu0 0.0
        %1047 = vmatprep.subr.mxu0 0.0
        %1048 = vmatpush1.msra.mxu0 0.0
        %1049 = vmatprep.subr.mxu0 0.0
        %1050 = vmatpush1.msra.mxu0 0.0
        %1051 = vmatprep.subr.mxu0 0.0
        %1052 = vmatpush1.msra.mxu0 0.0
        %1053 = vmatprep.subr.mxu0 0.0
        %1054 = vmatpush1.msra.mxu0 0.0
        %1055 = vmatprep.subr.mxu0 0.0
        %1056 = vmatpush1.msra.mxu0 0.0
        %1057 = vmatprep.subr.mxu0 0.0
        %1058 = vmatpush1.msra.mxu0 0.0
        %1059 = vmatprep.subr.mxu0 0.0
        %1060 = vmatpush1.msra.mxu0 0.0
        %1061 = vmatprep.subr.mxu0 0.0
        %1062 = vmatpush1.msra.mxu0 0.0
        %1063 = vmatprep.mubr.f32.mxu0 0.0
        %1064 = vmatmul.mubr.f32.gmra.mrb[0].mxu0 %v565
        %v1065 = vpop.f32.mrb[0].mxu0
        %v1066 = vadd.f32 %v562, %v1065
        %v1067 = vpop.f32.mrb[0].mxu0
        %1068 = vdwg.mxu0
        %1069 = vst [vmem:[#allocation2 + $0x3] sm:$0x1] %v1066
        %v1070 = vld [vmem:[%s394 + $0x4] sm:$0x1]
        %v1071 = vld [vmem:[%s430 + $0x4] sm:$0x1]
        %v1072 = vld [vmem:[%s432 + $0x4] sm:$0x1]
        %v1073 = vmul.f32 %v434, %v1070
        %v1074 = vmul.f32 %v436, %v1072
        %v1075 = vadd.f32 %v1073, %v1074
        %v1076 = vld [vmem:[%s338] sm:$0xff]
        %v1077 = vld [vmem:[%s338 + $0x8] sm:$0xff]
        %v1078 = vld [vmem:[%s338 + $0x10] sm:$0xff]
        %v1079 = vld [vmem:[%s338 + $0x18] sm:$0xff]
        %1080 = vset.pattern.permute.xlu0 4
        %1081 = vperm.xlu0 %1080, %v425
        %v1082 = vpop.permute.xlu0 %1081
        %1084 = vset.pattern.permute.xlu0 4
        %1085 = vperm.xlu0 %1084, %v426
        %v1086 = vpop.permute.xlu0 %1085
        %1088 = vset.pattern.permute.xlu0 4
        %1089 = vperm.xlu0 %1088, %v427
        %v1090 = vpop.permute.xlu0 %1089
        %1092 = vset.pattern.permute.xlu0 4
        %1093 = vperm.xlu0 %1092, %v428
        %v1094 = vpop.permute.xlu0 %1093
        %v1096 = vadd.f32 %v1076, %v1082
        %v1097 = vadd.f32 %v1077, %v1086
        %v1098 = vadd.f32 %v1078, %v1090
        %v1099 = vadd.f32 %v1079, %v1094
        %v1100 = vmul.f32 %v1071, %v1070
        %v1101 = vlaneseq
        %v1102 = vshrl.u32 %v1101, 7
        %v1103 = vsub.s32 0, %v1102
        %v1104 = vrot.slane %v1100, %v1103
        %v1105 = vmul.f32 %v471, %v1104
        %v1106 = vmul.f32 %v476, %v1104
        %v1107 = vmul.f32 %v481, %v1104
        %v1108 = vmul.f32 %v486, %v1104
        %v1109 = vadd.f32 %v1096, %v1105
        %v1110 = vadd.f32 %v1097, %v1106
        %v1111 = vadd.f32 %v1098, %v1107
        %v1112 = vadd.f32 %v1099, %v1108
        %v1113 = vsub.f32 1.0, %v1071
        %v1114 = vmul.f32 %v1113, %v1075
        %v1115 = vlaneseq
        %v1116 = vshrl.u32 %v1115, 7
        %v1117 = vsub.s32 0, %v1116
        %v1118 = vrot.slane %v1114, %v1117
        %v1119 = vmul.f32 %v504, %v1118
        %v1120 = vmul.f32 %v508, %v1118
        %v1121 = vmul.f32 %v512, %v1118
        %v1122 = vmul.f32 %v516, %v1118
        %v1123 = vadd.f32 %v1109, %v1119
        %v1124 = vadd.f32 %v1110, %v1120
        %v1125 = vadd.f32 %v1111, %v1121
        %v1126 = vadd.f32 %v1112, %v1122
        %v1127 = vlaneseq
        %v1128 = vshrl.u32 %v1127, 7
        %v1129 = vsub.s32 0, %v1128
        %v1130 = vrot.slane %v1071, %v1129
        %v1131 = vmul.f32 %v532, %v1130
        %v1132 = vmul.f32 %v536, %v1130
        %v1133 = vmul.f32 %v540, %v1130
        %v1134 = vmul.f32 %v544, %v1130
        %v1135 = vadd.f32 %v1123, %v1131
        %v1136 = vadd.f32 %v1124, %v1132
        %v1137 = vadd.f32 %v1125, %v1133
        %v1138 = vadd.f32 %v1126, %v1134
        %v1139 = vmax.f32 %v1135, 0.0
        %v1140 = vmax.f32 %v1136, 0.0
        %v1141 = vmax.f32 %v1137, 0.0
        %v1142 = vmax.f32 %v1138, 0.0
        %1143 = vmatprep.subr.mxu0 0.0
        %1144 = vmatpush1.msra.mxu0 %v1139
        %1145 = vmatprep.subr.mxu0 0.0
        %1146 = vmatpush1.msra.mxu0 %v1140
        %1147 = vmatprep.subr.mxu0 0.0
        %1148 = vmatpush1.msra.mxu0 %v1141
        %1149 = vmatprep.subr.mxu0 0.0
        %1150 = vmatpush1.msra.mxu0 %v1142
        %1151 = vmatprep.subr.mxu0 0.0
        %1152 = vmatpush1.msra.mxu0 0.0
        %1153 = vmatprep.subr.mxu0 0.0
        %1154 = vmatpush1.msra.mxu0 0.0
        %1155 = vmatprep.subr.mxu0 0.0
        %1156 = vmatpush1.msra.mxu0 0.0
        %1157 = vmatprep.subr.mxu0 0.0
        %1158 = vmatpush1.msra.mxu0 0.0
        %1159 = vmatprep.subr.mxu0 0.0
        %1160 = vmatpush1.msra.mxu0 0.0
        %1161 = vmatprep.subr.mxu0 0.0
        %1162 = vmatpush1.msra.mxu0 0.0
        %1163 = vmatprep.subr.mxu0 0.0
        %1164 = vmatpush1.msra.mxu0 0.0
        %1165 = vmatprep.subr.mxu0 0.0
        %1166 = vmatpush1.msra.mxu0 0.0
        %1167 = vmatprep.subr.mxu0 0.0
        %1168 = vmatpush1.msra.mxu0 0.0
        %1169 = vmatprep.subr.mxu0 0.0
        %1170 = vmatpush1.msra.mxu0 0.0
        %1171 = vmatprep.subr.mxu0 0.0
        %1172 = vmatpush1.msra.mxu0 0.0
        %1173 = vmatprep.subr.mxu0 0.0
        %1174 = vmatpush1.msra.mxu0 0.0
        %1175 = vmatprep.subr.mxu0 0.0
        %1176 = vmatpush1.msra.mxu0 0.0
        %1177 = vmatprep.subr.mxu0 0.0
        %1178 = vmatpush1.msra.mxu0 0.0
        %1179 = vmatprep.subr.mxu0 0.0
        %1180 = vmatpush1.msra.mxu0 0.0
        %1181 = vmatprep.subr.mxu0 0.0
        %1182 = vmatpush1.msra.mxu0 0.0
        %1183 = vmatprep.subr.mxu0 0.0
        %1184 = vmatpush1.msra.mxu0 0.0
        %1185 = vmatprep.subr.mxu0 0.0
        %1186 = vmatpush1.msra.mxu0 0.0
        %1187 = vmatprep.subr.mxu0 0.0
        %1188 = vmatpush1.msra.mxu0 0.0
        %1189 = vmatprep.subr.mxu0 0.0
        %1190 = vmatpush1.msra.mxu0 0.0
        %1191 = vmatprep.subr.mxu0 0.0
        %1192 = vmatpush1.msra.mxu0 0.0
        %1193 = vmatprep.subr.mxu0 0.0
        %1194 = vmatpush1.msra.mxu0 0.0
        %1195 = vmatprep.subr.mxu0 0.0
        %1196 = vmatpush1.msra.mxu0 0.0
        %1197 = vmatprep.subr.mxu0 0.0
        %1198 = vmatpush1.msra.mxu0 0.0
        %1199 = vmatprep.subr.mxu0 0.0
        %1200 = vmatpush1.msra.mxu0 0.0
        %1201 = vmatprep.subr.mxu0 0.0
        %1202 = vmatpush1.msra.mxu0 0.0
        %1203 = vmatprep.subr.mxu0 0.0
        %1204 = vmatpush1.msra.mxu0 0.0
        %1205 = vmatprep.subr.mxu0 0.0
        %1206 = vmatpush1.msra.mxu0 0.0
        %1207 = vmatprep.mubr.f32.mxu0 0.0
        %1208 = vmatmul.mubr.f32.gmra.mrb[0].mxu0 %v565
        %v1209 = vpop.f32.mrb[0].mxu0
        %v1210 = vadd.f32 %v562, %v1209
        %v1211 = vpop.f32.mrb[0].mxu0
        %1212 = vdwg.mxu0
        %1213 = vst [vmem:[#allocation2 + $0x4] sm:$0x1] %v1210
        %v1214 = vld [vmem:[%s394 + $0x5] sm:$0x1]
        %v1215 = vld [vmem:[%s430 + $0x5] sm:$0x1]
        %v1216 = vld [vmem:[%s432 + $0x5] sm:$0x1]
        %v1217 = vmul.f32 %v434, %v1214
        %v1218 = vmul.f32 %v436, %v1216
        %v1219 = vadd.f32 %v1217, %v1218
        %v1220 = vld [vmem:[%s338] sm:$0xff]
        %v1221 = vld [vmem:[%s338 + $0x8] sm:$0xff]
        %v1222 = vld [vmem:[%s338 + $0x10] sm:$0xff]
        %v1223 = vld [vmem:[%s338 + $0x18] sm:$0xff]
        %1224 = vset.pattern.permute.xlu0 5
        %1225 = vperm.xlu0 %1224, %v425
        %v1226 = vpop.permute.xlu0 %1225
        %1228 = vset.pattern.permute.xlu0 5
        %1229 = vperm.xlu0 %1228, %v426
        %v1230 = vpop.permute.xlu0 %1229
        %1232 = vset.pattern.permute.xlu0 5
        %1233 = vperm.xlu0 %1232, %v427
        %v1234 = vpop.permute.xlu0 %1233
        %1236 = vset.pattern.permute.xlu0 5
        %1237 = vperm.xlu0 %1236, %v428
        %v1238 = vpop.permute.xlu0 %1237
        %v1240 = vadd.f32 %v1220, %v1226
        %v1241 = vadd.f32 %v1221, %v1230
        %v1242 = vadd.f32 %v1222, %v1234
        %v1243 = vadd.f32 %v1223, %v1238
        %v1244 = vmul.f32 %v1215, %v1214
        %v1245 = vlaneseq
        %v1246 = vshrl.u32 %v1245, 7
        %v1247 = vsub.s32 0, %v1246
        %v1248 = vrot.slane %v1244, %v1247
        %v1249 = vmul.f32 %v471, %v1248
        %v1250 = vmul.f32 %v476, %v1248
        %v1251 = vmul.f32 %v481, %v1248
        %v1252 = vmul.f32 %v486, %v1248
        %v1253 = vadd.f32 %v1240, %v1249
        %v1254 = vadd.f32 %v1241, %v1250
        %v1255 = vadd.f32 %v1242, %v1251
        %v1256 = vadd.f32 %v1243, %v1252
        %v1257 = vsub.f32 1.0, %v1215
        %v1258 = vmul.f32 %v1257, %v1219
        %v1259 = vlaneseq
        %v1260 = vshrl.u32 %v1259, 7
        %v1261 = vsub.s32 0, %v1260
        %v1262 = vrot.slane %v1258, %v1261
        %v1263 = vmul.f32 %v504, %v1262
        %v1264 = vmul.f32 %v508, %v1262
        %v1265 = vmul.f32 %v512, %v1262
        %v1266 = vmul.f32 %v516, %v1262
        %v1267 = vadd.f32 %v1253, %v1263
        %v1268 = vadd.f32 %v1254, %v1264
        %v1269 = vadd.f32 %v1255, %v1265
        %v1270 = vadd.f32 %v1256, %v1266
        %v1271 = vlaneseq
        %v1272 = vshrl.u32 %v1271, 7
        %v1273 = vsub.s32 0, %v1272
        %v1274 = vrot.slane %v1215, %v1273
        %v1275 = vmul.f32 %v532, %v1274
        %v1276 = vmul.f32 %v536, %v1274
        %v1277 = vmul.f32 %v540, %v1274
        %v1278 = vmul.f32 %v544, %v1274
        %v1279 = vadd.f32 %v1267, %v1275
        %v1280 = vadd.f32 %v1268, %v1276
        %v1281 = vadd.f32 %v1269, %v1277
        %v1282 = vadd.f32 %v1270, %v1278
        %v1283 = vmax.f32 %v1279, 0.0
        %v1284 = vmax.f32 %v1280, 0.0
        %v1285 = vmax.f32 %v1281, 0.0
        %v1286 = vmax.f32 %v1282, 0.0
        %1287 = vmatprep.subr.mxu0 0.0
        %1288 = vmatpush1.msra.mxu0 %v1283
        %1289 = vmatprep.subr.mxu0 0.0
        %1290 = vmatpush1.msra.mxu0 %v1284
        %1291 = vmatprep.subr.mxu0 0.0
        %1292 = vmatpush1.msra.mxu0 %v1285
        %1293 = vmatprep.subr.mxu0 0.0
        %1294 = vmatpush1.msra.mxu0 %v1286
        %1295 = vmatprep.subr.mxu0 0.0
        %1296 = vmatpush1.msra.mxu0 0.0
        %1297 = vmatprep.subr.mxu0 0.0
        %1298 = vmatpush1.msra.mxu0 0.0
        %1299 = vmatprep.subr.mxu0 0.0
        %1300 = vmatpush1.msra.mxu0 0.0
        %1301 = vmatprep.subr.mxu0 0.0
        %1302 = vmatpush1.msra.mxu0 0.0
        %1303 = vmatprep.subr.mxu0 0.0
        %1304 = vmatpush1.msra.mxu0 0.0
        %1305 = vmatprep.subr.mxu0 0.0
        %1306 = vmatpush1.msra.mxu0 0.0
        %1307 = vmatprep.subr.mxu0 0.0
        %1308 = vmatpush1.msra.mxu0 0.0
        %1309 = vmatprep.subr.mxu0 0.0
        %1310 = vmatpush1.msra.mxu0 0.0
        %1311 = vmatprep.subr.mxu0 0.0
        %1312 = vmatpush1.msra.mxu0 0.0
        %1313 = vmatprep.subr.mxu0 0.0
        %1314 = vmatpush1.msra.mxu0 0.0
        %1315 = vmatprep.subr.mxu0 0.0
        %1316 = vmatpush1.msra.mxu0 0.0
        %1317 = vmatprep.subr.mxu0 0.0
        %1318 = vmatpush1.msra.mxu0 0.0
        %1319 = vmatprep.subr.mxu0 0.0
        %1320 = vmatpush1.msra.mxu0 0.0
        %1321 = vmatprep.subr.mxu0 0.0
        %1322 = vmatpush1.msra.mxu0 0.0
        %1323 = vmatprep.subr.mxu0 0.0
        %1324 = vmatpush1.msra.mxu0 0.0
        %1325 = vmatprep.subr.mxu0 0.0
        %1326 = vmatpush1.msra.mxu0 0.0
        %1327 = vmatprep.subr.mxu0 0.0
        %1328 = vmatpush1.msra.mxu0 0.0
        %1329 = vmatprep.subr.mxu0 0.0
        %1330 = vmatpush1.msra.mxu0 0.0
        %1331 = vmatprep.subr.mxu0 0.0
        %1332 = vmatpush1.msra.mxu0 0.0
        %1333 = vmatprep.subr.mxu0 0.0
        %1334 = vmatpush1.msra.mxu0 0.0
        %1335 = vmatprep.subr.mxu0 0.0
        %1336 = vmatpush1.msra.mxu0 0.0
        %1337 = vmatprep.subr.mxu0 0.0
        %1338 = vmatpush1.msra.mxu0 0.0
        %1339 = vmatprep.subr.mxu0 0.0
        %1340 = vmatpush1.msra.mxu0 0.0
        %1341 = vmatprep.subr.mxu0 0.0
        %1342 = vmatpush1.msra.mxu0 0.0
        %1343 = vmatprep.subr.mxu0 0.0
        %1344 = vmatpush1.msra.mxu0 0.0
        %1345 = vmatprep.subr.mxu0 0.0
        %1346 = vmatpush1.msra.mxu0 0.0
        %1347 = vmatprep.subr.mxu0 0.0
        %1348 = vmatpush1.msra.mxu0 0.0
        %1349 = vmatprep.subr.mxu0 0.0
        %1350 = vmatpush1.msra.mxu0 0.0
        %1351 = vmatprep.mubr.f32.mxu0 0.0
        %1352 = vmatmul.mubr.f32.gmra.mrb[0].mxu0 %v565
        %v1353 = vpop.f32.mrb[0].mxu0
        %v1354 = vadd.f32 %v562, %v1353
        %v1355 = vpop.f32.mrb[0].mxu0
        %1356 = vdwg.mxu0
        %1357 = vst [vmem:[#allocation2 + $0x5] sm:$0x1] %v1354
        %v1358 = vld [vmem:[%s394 + $0x6] sm:$0x1]
        %v1359 = vld [vmem:[%s430 + $0x6] sm:$0x1]
        %v1360 = vld [vmem:[%s432 + $0x6] sm:$0x1]
        %v1361 = vmul.f32 %v434, %v1358
        %v1362 = vmul.f32 %v436, %v1360
        %v1363 = vadd.f32 %v1361, %v1362
        %v1364 = vld [vmem:[%s338] sm:$0xff]
        %v1365 = vld [vmem:[%s338 + $0x8] sm:$0xff]
        %v1366 = vld [vmem:[%s338 + $0x10] sm:$0xff]
        %v1367 = vld [vmem:[%s338 + $0x18] sm:$0xff]
        %1368 = vset.pattern.permute.xlu0 6
        %1369 = vperm.xlu0 %1368, %v425
        %v1370 = vpop.permute.xlu0 %1369
        %1372 = vset.pattern.permute.xlu0 6
        %1373 = vperm.xlu0 %1372, %v426
        %v1374 = vpop.permute.xlu0 %1373
        %1376 = vset.pattern.permute.xlu0 6
        %1377 = vperm.xlu0 %1376, %v427
        %v1378 = vpop.permute.xlu0 %1377
        %1380 = vset.pattern.permute.xlu0 6
        %1381 = vperm.xlu0 %1380, %v428
        %v1382 = vpop.permute.xlu0 %1381
        %v1384 = vadd.f32 %v1364, %v1370
        %v1385 = vadd.f32 %v1365, %v1374
        %v1386 = vadd.f32 %v1366, %v1378
        %v1387 = vadd.f32 %v1367, %v1382
        %v1388 = vmul.f32 %v1359, %v1358
        %v1389 = vlaneseq
        %v1390 = vshrl.u32 %v1389, 7
        %v1391 = vsub.s32 0, %v1390
        %v1392 = vrot.slane %v1388, %v1391
        %v1393 = vmul.f32 %v471, %v1392
        %v1394 = vmul.f32 %v476, %v1392
        %v1395 = vmul.f32 %v481, %v1392
        %v1396 = vmul.f32 %v486, %v1392
        %v1397 = vadd.f32 %v1384, %v1393
        %v1398 = vadd.f32 %v1385, %v1394
        %v1399 = vadd.f32 %v1386, %v1395
        %v1400 = vadd.f32 %v1387, %v1396
        %v1401 = vsub.f32 1.0, %v1359
        %v1402 = vmul.f32 %v1401, %v1363
        %v1403 = vlaneseq
        %v1404 = vshrl.u32 %v1403, 7
        %v1405 = vsub.s32 0, %v1404
        %v1406 = vrot.slane %v1402, %v1405
        %v1407 = vmul.f32 %v504, %v1406
        %v1408 = vmul.f32 %v508, %v1406
        %v1409 = vmul.f32 %v512, %v1406
        %v1410 = vmul.f32 %v516, %v1406
        %v1411 = vadd.f32 %v1397, %v1407
        %v1412 = vadd.f32 %v1398, %v1408
        %v1413 = vadd.f32 %v1399, %v1409
        %v1414 = vadd.f32 %v1400, %v1410
        %v1415 = vlaneseq
        %v1416 = vshrl.u32 %v1415, 7
        %v1417 = vsub.s32 0, %v1416
        %v1418 = vrot.slane %v1359, %v1417
        %v1419 = vmul.f32 %v532, %v1418
        %v1420 = vmul.f32 %v536, %v1418
        %v1421 = vmul.f32 %v540, %v1418
        %v1422 = vmul.f32 %v544, %v1418
        %v1423 = vadd.f32 %v1411, %v1419
        %v1424 = vadd.f32 %v1412, %v1420
        %v1425 = vadd.f32 %v1413, %v1421
        %v1426 = vadd.f32 %v1414, %v1422
        %v1427 = vmax.f32 %v1423, 0.0
        %v1428 = vmax.f32 %v1424, 0.0
        %v1429 = vmax.f32 %v1425, 0.0
        %v1430 = vmax.f32 %v1426, 0.0
        %1431 = vmatprep.subr.mxu0 0.0
        %1432 = vmatpush1.msra.mxu0 %v1427
        %1433 = vmatprep.subr.mxu0 0.0
        %1434 = vmatpush1.msra.mxu0 %v1428
        %1435 = vmatprep.subr.mxu0 0.0
        %1436 = vmatpush1.msra.mxu0 %v1429
        %1437 = vmatprep.subr.mxu0 0.0
        %1438 = vmatpush1.msra.mxu0 %v1430
        %1439 = vmatprep.subr.mxu0 0.0
        %1440 = vmatpush1.msra.mxu0 0.0
        %1441 = vmatprep.subr.mxu0 0.0
        %1442 = vmatpush1.msra.mxu0 0.0
        %1443 = vmatprep.subr.mxu0 0.0
        %1444 = vmatpush1.msra.mxu0 0.0
        %1445 = vmatprep.subr.mxu0 0.0
        %1446 = vmatpush1.msra.mxu0 0.0
        %1447 = vmatprep.subr.mxu0 0.0
        %1448 = vmatpush1.msra.mxu0 0.0
        %1449 = vmatprep.subr.mxu0 0.0
        %1450 = vmatpush1.msra.mxu0 0.0
        %1451 = vmatprep.subr.mxu0 0.0
        %1452 = vmatpush1.msra.mxu0 0.0
        %1453 = vmatprep.subr.mxu0 0.0
        %1454 = vmatpush1.msra.mxu0 0.0
        %1455 = vmatprep.subr.mxu0 0.0
        %1456 = vmatpush1.msra.mxu0 0.0
        %1457 = vmatprep.subr.mxu0 0.0
        %1458 = vmatpush1.msra.mxu0 0.0
        %1459 = vmatprep.subr.mxu0 0.0
        %1460 = vmatpush1.msra.mxu0 0.0
        %1461 = vmatprep.subr.mxu0 0.0
        %1462 = vmatpush1.msra.mxu0 0.0
        %1463 = vmatprep.subr.mxu0 0.0
        %1464 = vmatpush1.msra.mxu0 0.0
        %1465 = vmatprep.subr.mxu0 0.0
        %1466 = vmatpush1.msra.mxu0 0.0
        %1467 = vmatprep.subr.mxu0 0.0
        %1468 = vmatpush1.msra.mxu0 0.0
        %1469 = vmatprep.subr.mxu0 0.0
        %1470 = vmatpush1.msra.mxu0 0.0
        %1471 = vmatprep.subr.mxu0 0.0
        %1472 = vmatpush1.msra.mxu0 0.0
        %1473 = vmatprep.subr.mxu0 0.0
        %1474 = vmatpush1.msra.mxu0 0.0
        %1475 = vmatprep.subr.mxu0 0.0
        %1476 = vmatpush1.msra.mxu0 0.0
        %1477 = vmatprep.subr.mxu0 0.0
        %1478 = vmatpush1.msra.mxu0 0.0
        %1479 = vmatprep.subr.mxu0 0.0
        %1480 = vmatpush1.msra.mxu0 0.0
        %1481 = vmatprep.subr.mxu0 0.0
        %1482 = vmatpush1.msra.mxu0 0.0
        %1483 = vmatprep.subr.mxu0 0.0
        %1484 = vmatpush1.msra.mxu0 0.0
        %1485 = vmatprep.subr.mxu0 0.0
        %1486 = vmatpush1.msra.mxu0 0.0
        %1487 = vmatprep.subr.mxu0 0.0
        %1488 = vmatpush1.msra.mxu0 0.0
        %1489 = vmatprep.subr.mxu0 0.0
        %1490 = vmatpush1.msra.mxu0 0.0
        %1491 = vmatprep.subr.mxu0 0.0
        %1492 = vmatpush1.msra.mxu0 0.0
        %1493 = vmatprep.subr.mxu0 0.0
        %1494 = vmatpush1.msra.mxu0 0.0
        %1495 = vmatprep.mubr.f32.mxu0 0.0
        %1496 = vmatmul.mubr.f32.gmra.mrb[0].mxu0 %v565
        %v1497 = vpop.f32.mrb[0].mxu0
        %v1498 = vadd.f32 %v562, %v1497
        %v1499 = vpop.f32.mrb[0].mxu0
        %1500 = vdwg.mxu0
        %1501 = vst [vmem:[#allocation2 + $0x6] sm:$0x1] %v1498
        %v1502 = vld [vmem:[%s394 + $0x7] sm:$0x1]
        %v1503 = vld [vmem:[%s430 + $0x7] sm:$0x1]
        %v1504 = vld [vmem:[%s432 + $0x7] sm:$0x1]
        %v1505 = vmul.f32 %v434, %v1502
        %v1506 = vmul.f32 %v436, %v1504
        %v1507 = vadd.f32 %v1505, %v1506
        %v1508 = vld [vmem:[%s338] sm:$0xff]
        %v1509 = vld [vmem:[%s338 + $0x8] sm:$0xff]
        %v1510 = vld [vmem:[%s338 + $0x10] sm:$0xff]
        %v1511 = vld [vmem:[%s338 + $0x18] sm:$0xff]
        %1512 = vset.pattern.permute.xlu0 7
        %1513 = vperm.xlu0 %1512, %v425
        %v1514 = vpop.permute.xlu0 %1513
        %1516 = vset.pattern.permute.xlu0 7
        %1517 = vperm.xlu0 %1516, %v426
        %v1518 = vpop.permute.xlu0 %1517
        %1520 = vset.pattern.permute.xlu0 7
        %1521 = vperm.xlu0 %1520, %v427
        %v1522 = vpop.permute.xlu0 %1521
        %1524 = vset.pattern.permute.xlu0 7
        %1525 = vperm.xlu0 %1524, %v428
        %v1526 = vpop.permute.xlu0 %1525
        %v1528 = vadd.f32 %v1508, %v1514
        %v1529 = vadd.f32 %v1509, %v1518
        %v1530 = vadd.f32 %v1510, %v1522
        %v1531 = vadd.f32 %v1511, %v1526
        %v1532 = vmul.f32 %v1503, %v1502
        %v1533 = vlaneseq
        %v1534 = vshrl.u32 %v1533, 7
        %v1535 = vsub.s32 0, %v1534
        %v1536 = vrot.slane %v1532, %v1535
        %v1537 = vmul.f32 %v471, %v1536
        %v1538 = vmul.f32 %v476, %v1536
        %v1539 = vmul.f32 %v481, %v1536
        %v1540 = vmul.f32 %v486, %v1536
        %v1541 = vadd.f32 %v1528, %v1537
        %v1542 = vadd.f32 %v1529, %v1538
        %v1543 = vadd.f32 %v1530, %v1539
        %v1544 = vadd.f32 %v1531, %v1540
        %v1545 = vsub.f32 1.0, %v1503
        %v1546 = vmul.f32 %v1545, %v1507
        %v1547 = vlaneseq
        %v1548 = vshrl.u32 %v1547, 7
        %v1549 = vsub.s32 0, %v1548
        %v1550 = vrot.slane %v1546, %v1549
        %v1551 = vmul.f32 %v504, %v1550
        %v1552 = vmul.f32 %v508, %v1550
        %v1553 = vmul.f32 %v512, %v1550
        %v1554 = vmul.f32 %v516, %v1550
        %v1555 = vadd.f32 %v1541, %v1551
        %v1556 = vadd.f32 %v1542, %v1552
        %v1557 = vadd.f32 %v1543, %v1553
        %v1558 = vadd.f32 %v1544, %v1554
        %v1559 = vlaneseq
        %v1560 = vshrl.u32 %v1559, 7
        %v1561 = vsub.s32 0, %v1560
        %v1562 = vrot.slane %v1503, %v1561
        %v1563 = vmul.f32 %v532, %v1562
        %v1564 = vmul.f32 %v536, %v1562
        %v1565 = vmul.f32 %v540, %v1562
        %v1566 = vmul.f32 %v544, %v1562
        %v1567 = vadd.f32 %v1555, %v1563
        %v1568 = vadd.f32 %v1556, %v1564
        %v1569 = vadd.f32 %v1557, %v1565
        %v1570 = vadd.f32 %v1558, %v1566
        %v1571 = vmax.f32 %v1567, 0.0
        %v1572 = vmax.f32 %v1568, 0.0
        %v1573 = vmax.f32 %v1569, 0.0
        %v1574 = vmax.f32 %v1570, 0.0
        %1575 = vmatprep.subr.mxu0 0.0
        %1576 = vmatpush1.msra.mxu0 %v1571
        %1577 = vmatprep.subr.mxu0 0.0
        %1578 = vmatpush1.msra.mxu0 %v1572
        %1579 = vmatprep.subr.mxu0 0.0
        %1580 = vmatpush1.msra.mxu0 %v1573
        %1581 = vmatprep.subr.mxu0 0.0
        %1582 = vmatpush1.msra.mxu0 %v1574
        %1583 = vmatprep.subr.mxu0 0.0
        %1584 = vmatpush1.msra.mxu0 0.0
        %1585 = vmatprep.subr.mxu0 0.0
        %1586 = vmatpush1.msra.mxu0 0.0
        %1587 = vmatprep.subr.mxu0 0.0
        %1588 = vmatpush1.msra.mxu0 0.0
        %1589 = vmatprep.subr.mxu0 0.0
        %1590 = vmatpush1.msra.mxu0 0.0
        %1591 = vmatprep.subr.mxu0 0.0
        %1592 = vmatpush1.msra.mxu0 0.0
        %1593 = vmatprep.subr.mxu0 0.0
        %1594 = vmatpush1.msra.mxu0 0.0
        %1595 = vmatprep.subr.mxu0 0.0
        %1596 = vmatpush1.msra.mxu0 0.0
        %1597 = vmatprep.subr.mxu0 0.0
        %1598 = vmatpush1.msra.mxu0 0.0
        %1599 = vmatprep.subr.mxu0 0.0
        %1600 = vmatpush1.msra.mxu0 0.0
        %1601 = vmatprep.subr.mxu0 0.0
        %1602 = vmatpush1.msra.mxu0 0.0
        %1603 = vmatprep.subr.mxu0 0.0
        %1604 = vmatpush1.msra.mxu0 0.0
        %1605 = vmatprep.subr.mxu0 0.0
        %1606 = vmatpush1.msra.mxu0 0.0
        %1607 = vmatprep.subr.mxu0 0.0
        %1608 = vmatpush1.msra.mxu0 0.0
        %1609 = vmatprep.subr.mxu0 0.0
        %1610 = vmatpush1.msra.mxu0 0.0
        %1611 = vmatprep.subr.mxu0 0.0
        %1612 = vmatpush1.msra.mxu0 0.0
        %1613 = vmatprep.subr.mxu0 0.0
        %1614 = vmatpush1.msra.mxu0 0.0
        %1615 = vmatprep.subr.mxu0 0.0
        %1616 = vmatpush1.msra.mxu0 0.0
        %1617 = vmatprep.subr.mxu0 0.0
        %1618 = vmatpush1.msra.mxu0 0.0
        %1619 = vmatprep.subr.mxu0 0.0
        %1620 = vmatpush1.msra.mxu0 0.0
        %1621 = vmatprep.subr.mxu0 0.0
        %1622 = vmatpush1.msra.mxu0 0.0
        %1623 = vmatprep.subr.mxu0 0.0
        %1624 = vmatpush1.msra.mxu0 0.0
        %1625 = vmatprep.subr.mxu0 0.0
        %1626 = vmatpush1.msra.mxu0 0.0
        %1627 = vmatprep.subr.mxu0 0.0
        %1628 = vmatpush1.msra.mxu0 0.0
        %1629 = vmatprep.subr.mxu0 0.0
        %1630 = vmatpush1.msra.mxu0 0.0
        %1631 = vmatprep.subr.mxu0 0.0
        %1632 = vmatpush1.msra.mxu0 0.0
        %1633 = vmatprep.subr.mxu0 0.0
        %1634 = vmatpush1.msra.mxu0 0.0
        %1635 = vmatprep.subr.mxu0 0.0
        %1636 = vmatpush1.msra.mxu0 0.0
        %1637 = vmatprep.subr.mxu0 0.0
        %1638 = vmatpush1.msra.mxu0 0.0
        %1639 = vmatprep.mubr.f32.mxu0 0.0
        %1640 = vmatmul.mubr.f32.gmra.mrb[0].mxu0 %v565
        %v1641 = vpop.f32.mrb[0].mxu0
        %v1642 = vadd.f32 %v562, %v1641
        %v1643 = vpop.f32.mrb[0].mxu0
        %1644 = vdwg.mxu0
        %1645 = vst [vmem:[#allocation2 + $0x7] sm:$0x1] %v1642
        %v1646 = vld [vmem:[%s6] sm:$0xff]
        %v1647 = vld [vmem:[#allocation2] sm:$0xff]
        %vm1648 = vcmask 64512
        %v1650 = vsel %vm1648, %v1646, 0
        %1652 = vmatprep.subr.mxu0 0.0
        %1653 = vmatpush1.msra.mxu0 %v1647
        %1654 = vmatprep.subr.mxu0 0.0
        %1655 = vmatpush1.msra.mxu0 0.0
        %1656 = vmatprep.subr.mxu0 0.0
        %1657 = vmatpush1.msra.mxu0 0.0
        %1658 = vmatprep.subr.mxu0 0.0
        %1659 = vmatpush1.msra.mxu0 0.0
        %1660 = vmatprep.subr.mxu0 0.0
        %1661 = vmatpush1.msra.mxu0 0.0
        %1662 = vmatprep.subr.mxu0 0.0
        %1663 = vmatpush1.msra.mxu0 0.0
        %1664 = vmatprep.subr.mxu0 0.0
        %1665 = vmatpush1.msra.mxu0 0.0
        %1666 = vmatprep.subr.mxu0 0.0
        %1667 = vmatpush1.msra.mxu0 0.0
        %1668 = vmatprep.subr.mxu0 0.0
        %1669 = vmatpush1.msra.mxu0 0.0
        %1670 = vmatprep.subr.mxu0 0.0
        %1671 = vmatpush1.msra.mxu0 0.0
        %1672 = vmatprep.subr.mxu0 0.0
        %1673 = vmatpush1.msra.mxu0 0.0
        %1674 = vmatprep.subr.mxu0 0.0
        %1675 = vmatpush1.msra.mxu0 0.0
        %1676 = vmatprep.subr.mxu0 0.0
        %1677 = vmatpush1.msra.mxu0 0.0
        %1678 = vmatprep.subr.mxu0 0.0
        %1679 = vmatpush1.msra.mxu0 0.0
        %1680 = vmatprep.subr.mxu0 0.0
        %1681 = vmatpush1.msra.mxu0 0.0
        %1682 = vmatprep.subr.mxu0 0.0
        %1683 = vmatpush1.msra.mxu0 0.0
        %1684 = vmatprep.subr.mxu0 0.0
        %1685 = vmatpush1.msra.mxu0 0.0
        %1686 = vmatprep.subr.mxu0 0.0
        %1687 = vmatpush1.msra.mxu0 0.0
        %1688 = vmatprep.subr.mxu0 0.0
        %1689 = vmatpush1.msra.mxu0 0.0
        %1690 = vmatprep.subr.mxu0 0.0
        %1691 = vmatpush1.msra.mxu0 0.0
        %1692 = vmatprep.subr.mxu0 0.0
        %1693 = vmatpush1.msra.mxu0 0.0
        %1694 = vmatprep.subr.mxu0 0.0
        %1695 = vmatpush1.msra.mxu0 0.0
        %1696 = vmatprep.subr.mxu0 0.0
        %1697 = vmatpush1.msra.mxu0 0.0
        %1698 = vmatprep.subr.mxu0 0.0
        %1699 = vmatpush1.msra.mxu0 0.0
        %1700 = vmatprep.subr.mxu0 0.0
        %1701 = vmatpush1.msra.mxu0 0.0
        %1702 = vmatprep.subr.mxu0 0.0
        %1703 = vmatpush1.msra.mxu0 0.0
        %1704 = vmatprep.subr.mxu0 0.0
        %1705 = vmatpush1.msra.mxu0 0.0
        %1706 = vmatprep.subr.mxu0 0.0
        %1707 = vmatpush1.msra.mxu0 0.0
        %1708 = vmatprep.subr.mxu0 0.0
        %1709 = vmatpush1.msra.mxu0 0.0
        %1710 = vmatprep.subr.mxu0 0.0
        %1711 = vmatpush1.msra.mxu0 0.0
        %1712 = vmatprep.subr.mxu0 0.0
        %1713 = vmatpush1.msra.mxu0 0.0
        %1714 = vmatprep.subr.mxu0 0.0
        %1715 = vmatpush1.msra.mxu0 0.0
        %1716 = vmatprep.mubr.f32.mxu0 0.0
        %1717 = vmatmul.mubr.f32.gmra.mrb[0].mxu0 %v1650
        %v1718 = vpop.f32.mrb[0].mxu0
        %v1719 = vadd.f32 0.0, %v1718
        %v1720 = vpop.f32.mrb[0].mxu0
        %1721 = vdwg.mxu0
        %v1722 = vld [vmem:[%s430] sm:$0xff]
        %s1723 = scalar_lea.vmem %s394, 16
        %v1724 = vld [vmem:[%s1723] sm:$0xff]
        %v1725 = vld [vmem:[%s432] sm:$0xff]
        %v1726 = vsub.f32 %v1724, %v1722
        %v1727 = vsub.f32 %v1725, %v1719
        %v1728 = vmul.f32 %v1727, %v1726
        %v1729 = vmul.f32 %v1728, %v1728
        %1730 = vadd.xlane.f32.xlu0 %v1729
        %v1731 = vpop.xlane.xlu0 %1730
        %v1732 = vrot.slane %v1731, 4
        %v1733 = vadd.f32 %v1731, %v1732
        %v1734 = vrot.slane %v1733, 2
        %v1735 = vadd.f32 %v1733, %v1734
        %v1736 = vrot.slane %v1735, 1
        %v1737 = vadd.f32 %v1735, %v1736
        %s1738 = vtos %v1737
        %v1739 = vstv %s1738
        %v1740 = vadd.f32 %v1739, 0.0
        %vm1741 = vcmask 0
        %1742 = vst.msk [vmem:[%s400] sm:$0x1] %vm1741, %v1740
        %1743 = vadd.xlane.f32.xlu0 %v1726
        %v1744 = vpop.xlane.xlu0 %1743
        %v1745 = vrot.slane %v1744, 4
        %v1746 = vadd.f32 %v1744, %v1745
        %v1747 = vrot.slane %v1746, 2
        %v1748 = vadd.f32 %v1746, %v1747
        %v1749 = vrot.slane %v1748, 1
        %v1750 = vadd.f32 %v1748, %v1749
        %s1751 = vtos %v1750
        %v1752 = vstv %s1751
        %v1753 = vadd.f32 %v1752, 0.0
        %1754 = vst.msk [vmem:[%s406] sm:$0x1] %vm1741, %v1753
        %p1755 = scmp.lt.s32.totalorder %s28, 1
        %s1756 = scalar_select %p1755, %s28, 1
        %p1757 = scmp.lt.s32.totalorder %s29, 0
        %s1758 = scalar_select %p1757, %s29, 0
        %s1759 = sadd.s32 %s1758, %s1756
        %s1760 = scalar_lea.vmem %s7, %s1759
        %p1761 = scmp.lt.s32.totalorder %s28, 1
        %s1762 = scalar_select %p1761, %s28, 1
        %p1763 = scmp.lt.s32.totalorder %s29, 0
        %s1764 = scalar_select %p1763, %s29, 0
        %s1765 = sadd.s32 %s1764, %s1762
        %s1766 = scalar_lea.vmem %s8, %s1765
        // Predicated region
        $region57: #{tpu_custom_call.1} parent=47 // pred_check
          %p1767 = pneg %p217
        $region58: #{tpu_custom_call.1} parent=47 // pred_check_branch
          %1769 = sbr.rel (%p1767) target = $region60
        $region59: #{tpu_custom_call.1} parent=47 // pred_region
          _
        $region60: #{tpu_custom_call.1} parent=47 // pred_fallthru
          _
        // Predicated region
        $region61: #{tpu_custom_call.1} parent=47 // pred_check
          %p1770 = pneg %p245
        $region62: #{tpu_custom_call.1} parent=47 // pred_check_branch
          %1772 = sbr.rel (%p1770) target = $region64
        $region63: #{tpu_custom_call.1} parent=47 // pred_region
          _
        $region64: #{tpu_custom_call.1} parent=47 // pred_fallthru
          _
      $region48: #{tpu_custom_call.1} parent=5 // pred_fallthru
        _
      %p1773 = scmp.le.s32.totalorder 2, %s19
      // Predicated region
      $region65: #{tpu_custom_call.1} parent=5 // pred_check
        %p1774 = pneg %p1773
      $region66: #{tpu_custom_call.1} parent=5 // pred_check_branch
        %1776 = sbr.rel (%p1774) target = $region68
      $region67: #{tpu_custom_call.1} parent=5 // pred_region
        %s1777 = ssub.s32 %s19, 2
        // Predicated region
        $region69: #{tpu_custom_call.1} parent=67 // pred_check
          %p1778 = pneg %p223
        $region70: #{tpu_custom_call.1} parent=67 // pred_check_branch
          %1780 = sbr.rel (%p1778) target = $region72
        $region71: #{tpu_custom_call.1} parent=67 // pred_region
          %p1781 = scmp.lt.s32.totalorder %s30, 1
          %s1782 = scalar_select %p1781, %s30, 1
          %p1783 = scmp.lt.s32.totalorder %s31, 0
          %s1784 = scalar_select %p1783, %s31, 0
          %s1785 = sadd.s32 %s1784, %s1782
          %s1786 = scalar_lea.vmem %s7, %s1785
        $region72: #{tpu_custom_call.1} parent=67 // pred_fallthru
          _
        // Predicated region
        $region73: #{tpu_custom_call.1} parent=67 // pred_check
          %p1787 = pneg %p251
        $region74: #{tpu_custom_call.1} parent=67 // pred_check_branch
          %1789 = sbr.rel (%p1787) target = $region76
        $region75: #{tpu_custom_call.1} parent=67 // pred_region
          %p1790 = scmp.lt.s32.totalorder %s30, 1
          %s1791 = scalar_select %p1790, %s30, 1
          %p1792 = scmp.lt.s32.totalorder %s31, 0
          %s1793 = scalar_select %p1792, %s31, 0
          %s1794 = sadd.s32 %s1793, %s1791
          %s1795 = scalar_lea.vmem %s8, %s1794
        $region76: #{tpu_custom_call.1} parent=67 // pred_fallthru
          _
      $region68: #{tpu_custom_call.1} parent=5 // pred_fallthru
        _
    $region6: #{tpu_custom_call.1} parent=1 // loop_footer
      %s23 = sadd.s32 1, %s19
    $region7: #{tpu_custom_call.1} parent=1 // loop_footer_branch
      %18 = sbr.rel target = $region3
    $region8: #{tpu_custom_call.1} parent=1 // loop_exit
      _
    %1796 = vsyncpa [#allocation4], 1
    %s1797 = scalar_lea.sflag [#allocation4], 1
    %1798 = vsyncpa %s1797, 1
    %1799 = vsyncpa [#allocation5], 1
    %s1800 = scalar_lea.sflag [#allocation5], 1
    %1801 = vsyncpa %s1800, 1

</llo_original>
